<compile_context>
chip_gen: v7x
topology: tpu7x:2x2x1
jax: 0.10.0
libtpu: 0.0.40
codegen_flags: <defaults>
</compile_context>

<pallas_src>
import jax
import jax.numpy as jnp
from jax.experimental import pallas as pl
from jax.experimental.pallas import tpu as pltpu

TILE_LANES = 2048          # max lane-axis (spatial) tile for the fused kernel
SILOG_TILE_ROWS = 2048     # row tile (x 128 lanes) for the silog reduction kernel
VARIANCE_FOCUS = 0.85      # silog_loss(variance_focus=0.85) as in the module
_LANE = 128


def _vmem_limit_bytes():
    """~75% of physical VMEM (v5e/v6e: 128 MiB, v7x: 64 MiB), capped at 100 MiB."""
    try:
        cap = pltpu.get_tpu_info().vmem_capacity_bytes
    except Exception:
        cap = 64 * 1024 * 1024
    return int(min(cap * 3 // 4, 100 * 1024 * 1024))


def _pick_lane_tile(hw, batch, max_tile=TILE_LANES):
    """Largest multiple-of-128 tile <= max_tile dividing hw (fallback: full extent).

    Tries to expose >=2 parallel blocks so v7x's two TensorCores both get work.
    """
    if hw % 128 != 0:
        return hw                               # full-extent block (always legal)
    tile = min(max_tile, hw)
    tile -= tile % 128
    while tile > 128 and hw % tile != 0:
        tile -= 128
    if tile <= 0 or hw % tile != 0:
        return hw
    if batch * (hw // tile) < 2 and tile % 256 == 0:
        tile //= 2
    return tile


# ----------------------------------------------------------------------------
# Fused backbone (teacher+student, feat+depth) + camera-mean + head kernel
# ----------------------------------------------------------------------------
def _make_fused_kernel(n_cam, c_feat, d_bins):
    """Grid = (batch [parallel], spatial blocks [parallel], n_cam [arbitrary]).

    Per grid step the shared input tile x (C_in, tile) is read ONCE and feeds a
    SINGLE fused MXU matmul (teacher+student feature + teacher+student depth
    projections concatenated along the output-channel axis).  BEV features are
    accumulated across the camera axis in f32 VMEM scratch, divided by n_cam on
    the last camera and fed straight into both task heads -- the BEV tensor
    never makes an extra HBM round trip.  NOTE: the camera axis MUST remain the
    last ('arbitrary') grid axis with camera-invariant bev/preds index_maps.
    """
    inv_cam = 1.0 / float(n_cam)

    def softmax_sublane(z):                      # softmax over depth bins (sublane axis)
        z = z - jnp.max(z, axis=0, keepdims=True)
        e = jnp.exp(z)
        s = jnp.sum(e, axis=0, keepdims=True)
        r = pl.reciprocal(s, approx=True)        # EUP fast path ...
        r = r * (2.0 - s * r)                    # ... + one Newton step (near-exact)
        return e * r

    def kernel(x_ref, w_all_ref, b_all_ref, wh_ref, bh_ref,
               dep_t_ref, dep_s_ref, bev_t_ref, bev_s_ref, pr_t_ref, pr_s_ref,
               acc_t, acc_s):
        cam = pl.program_id(2)
        x = x_ref[...]                                          # (C_in, tile) bf16

        # ONE wide MXU matmul for all four point-wise projections.
        y = jnp.dot(w_all_ref[...], x,
                    preferred_element_type=jnp.float32) + b_all_ref[...]   # (2F+2D, tile) f32

        feat_t = y[0:c_feat]
        feat_s = y[c_feat:2 * c_feat]
        dep_t_ref[...] = softmax_sublane(
            y[2 * c_feat:2 * c_feat + d_bins]).astype(dep_t_ref.dtype)
        dep_s_ref[...] = softmax_sublane(
            y[2 * c_feat + d_bins:2 * c_feat + 2 * d_bins]).astype(dep_s_ref.dtype)

        @pl.when(cam == 0)
        def _():
            acc_t[...] = jnp.zeros_like(acc_t)
            acc_s[...] = jnp.zeros_like(acc_s)

        acc_t[...] += feat_t
        acc_s[...] += feat_s

        @pl.when(cam == n_cam - 1)
        def _():
            bev_t = (acc_t[...] * inv_cam).astype(jnp.bfloat16)   # camera mean
            bev_s = (acc_s[...] * inv_cam).astype(jnp.bfloat16)
            bev_t_ref[...] = bev_t.astype(bev_t_ref.dtype)
            bev_s_ref[...] = bev_s.astype(bev_s_ref.dtype)
            pr_t_ref[...] = (jnp.dot(wh_ref[0], bev_t,
                                     preferred_element_type=jnp.float32) + bh_ref[0])
            pr_s_ref[...] = (jnp.dot(wh_ref[1], bev_s,
                                     preferred_element_type=jnp.float32) + bh_ref[1])

    return kernel


@jax.jit
def _fused_forward(params, x):
    """x: (B, N_cam, C_in, H, W).

    Returns NCHW outputs:
      preds_t (B, n_cls, H, W) f32, preds_s (B, n_cls, H, W) f32,
      x_t     (B, C_feat, H, W) bf16, x_s   (B, C_feat, H, W) bf16,
      depth_t (B*N_cam, D, H, W) bf16, depth_s (B*N_cam, D, H, W) bf16
    """
    # TODO(synk): real BaseLSSFPN (image backbone + view transform using mats_dict
    # geometry) and BEVDepthHead (CenterPoint multi-task heads) are not provided;
    # point-wise stand-ins are used and geometry inputs are accepted but unused.
    B, N, C, H, W = x.shape
    hw = H * W
    tile = _pick_lane_tile(hw, B)
    assert hw % tile == 0

    # NCHW (B,N,C,H,W) -> camera-major channel-first rows-last (N,B,C,H*W).
    # Only the two leading (major) axes swap -> cheap block copy; bf16 cast
    # halves the dominant HBM read.
    x_cl = jnp.transpose(x, (1, 0, 2, 3, 4)).reshape(N, B, C, hw).astype(jnp.bfloat16)

    bt, bs = params["backbone_t"], params["backbone_s"]
    ht, hs = params["head_t"], params["head_s"]
    c_feat = bt["w_feat"].shape[1]
    d_bins = bt["w_depth"].shape[1]
    n_cls = ht["w_head"].shape[1]
    f_all = 2 * c_feat + 2 * d_bins

    # Fuse the four point-wise projections into a single (2F+2D, C_in) bf16 weight.
    w_all = jnp.concatenate(
        [bt["w_feat"].T, bs["w_feat"].T, bt["w_depth"].T, bs["w_depth"].T],
        axis=0).astype(jnp.bfloat16)                                          # (2F+2D, C)
    b_all = jnp.concatenate(
        [bt["b_feat"], bs["b_feat"], bt["b_depth"], bs["b_depth"]]
    ).astype(jnp.float32)[:, None]                                            # (2F+2D, 1)
    w_head = jnp.stack([ht["w_head"].T, hs["w_head"].T]).astype(jnp.bfloat16)  # (2, K, F)
    b_head = jnp.stack([ht["b_head"], hs["b_head"]]).astype(jnp.float32)[:, :, None]  # (2, K, 1)

    grid = (B, hw // tile, N)   # camera axis last ('arbitrary') -> accumulator correctness
    dep_t, dep_s, bev_t, bev_s, pr_t, pr_s = pl.pallas_call(
        _make_fused_kernel(N, c_feat, d_bins),
        out_shape=(
            jax.ShapeDtypeStruct((B, N, d_bins, hw), jnp.bfloat16),   # depth_t
            jax.ShapeDtypeStruct((B, N, d_bins, hw), jnp.bfloat16),   # depth_s
            jax.ShapeDtypeStruct((B, c_feat, hw), jnp.bfloat16),      # x_t (bev)
            jax.ShapeDtypeStruct((B, c_feat, hw), jnp.bfloat16),      # x_s (bev)
            jax.ShapeDtypeStruct((B, n_cls, hw), jnp.float32),        # preds_t
            jax.ShapeDtypeStruct((B, n_cls, hw), jnp.float32),        # preds_s
        ),
        grid_spec=pltpu.PrefetchScalarGridSpec(
            num_scalar_prefetch=0,
            grid=grid,
            in_specs=[
                pl.BlockSpec((None, None, C, tile), lambda b, i, c: (c, b, 0, i)),  # x (read once)
                pl.BlockSpec((f_all, C), lambda b, i, c: (0, 0)),                   # fused W (t|s feat+depth)
                pl.BlockSpec((f_all, 1), lambda b, i, c: (0, 0)),                   # fused bias
                pl.BlockSpec((2, n_cls, c_feat), lambda b, i, c: (0, 0, 0)),        # head W (t|s)
                pl.BlockSpec((2, n_cls, 1), lambda b, i, c: (0, 0, 0)),             # head bias
            ],
            out_specs=[
                pl.BlockSpec((None, None, d_bins, tile), lambda b, i, c: (b, c, 0, i)),
                pl.BlockSpec((None, None, d_bins, tile), lambda b, i, c: (b, c, 0, i)),
                pl.BlockSpec((None, c_feat, tile), lambda b, i, c: (b, 0, i)),      # camera-invariant
                pl.BlockSpec((None, c_feat, tile), lambda b, i, c: (b, 0, i)),
                pl.BlockSpec((None, n_cls, tile), lambda b, i, c: (b, 0, i)),
                pl.BlockSpec((None, n_cls, tile), lambda b, i, c: (b, 0, i)),
            ],
            scratch_shapes=[pltpu.VMEM((c_feat, tile), jnp.float32),   # f32 camera accumulators
                            pltpu.VMEM((c_feat, tile), jnp.float32)],
        ),
        compiler_params=pltpu.CompilerParams(
            dimension_semantics=("parallel", "parallel", "arbitrary"),
            vmem_limit_bytes=_vmem_limit_bytes(),
        ),
    )(x_cl, w_all, b_all, w_head, b_head)

    # Outputs are already channel-first: pure reshapes, no transposes.
    return (pr_t.reshape(B, n_cls, H, W), pr_s.reshape(B, n_cls, H, W),
            bev_t.reshape(B, c_feat, H, W), bev_s.reshape(B, c_feat, H, W),
            dep_t.reshape(B * N, d_bins, H, W), dep_s.reshape(B * N, d_bins, H, W))


# ----------------------------------------------------------------------------
# silog_loss as a tiled Pallas reduction
# ----------------------------------------------------------------------------
def _silog_kernel(est_ref, gt_ref, mask_ref, out_ref, sd_ref, sd2_ref, cnt_ref):
    i = pl.program_id(0)

    @pl.when(i == 0)
    def _():
        sd_ref[...] = jnp.zeros_like(sd_ref)
        sd2_ref[...] = jnp.zeros_like(sd2_ref)
        cnt_ref[...] = jnp.zeros_like(cnt_ref)

    m = mask_ref[...] != 0
    est = jnp.maximum(est_ref[...], 1e-12)   # clamp so log never sees <=0 even off-mask
    gt = jnp.maximum(gt_ref[...], 1e-12)
    d = jnp.where(m, jnp.log(est) - jnp.log(gt), 0.0)

    sd_ref[...] += jnp.sum(d, axis=0, keepdims=True)          # per-lane partial sums
    sd2_ref[...] += jnp.sum(d * d, axis=0, keepdims=True)
    cnt_ref[...] += jnp.sum(m.astype(jnp.float32), axis=0, keepdims=True)

    @pl.when(i == pl.num_programs(0) - 1)
    def _():
        cnt = jnp.maximum(jnp.sum(cnt_ref[...]), 1.0)          # guard 0/0
        mean_d = jnp.sum(sd_ref[...]) / cnt
        mean_d2 = jnp.sum(sd2_ref[...]) / cnt
        loss = jnp.sqrt(jnp.maximum(mean_d2 - VARIANCE_FOCUS * mean_d * mean_d, 0.0)) * 10.0
        out_ref[...] = jnp.full(out_ref.shape, loss, dtype=out_ref.dtype)


@jax.jit
def silog_loss_pallas(depth_est, depth_gt, mask):
    """Pallas implementation of silog_loss.forward (masked scale-invariant log loss)."""
    est = depth_est.reshape(-1).astype(jnp.float32)
    gt = depth_gt.reshape(-1).astype(jnp.float32)
    msk = mask.reshape(-1).astype(jnp.int8)        # narrow mask stream (HBM-bandwidth-bound)

    n = est.shape[0]
    rows = -(-n // _LANE)
    block_rows = min(SILOG_TILE_ROWS, -(-rows // 32) * 32)   # keep int8 sublanes %32
    rows_p = -(-rows // block_rows) * block_rows
    pad = rows_p * _LANE - n
    if pad:
        est = jnp.pad(est, (0, pad), constant_values=1.0)
        gt = jnp.pad(gt, (0, pad), constant_values=1.0)
        msk = jnp.pad(msk, (0, pad), constant_values=0)
    est2d = est.reshape(rows_p, _LANE)
    gt2d = gt.reshape(rows_p, _LANE)
    msk2d = msk.reshape(rows_p, _LANE)

    out = pl.pallas_call(
        _silog_kernel,
        out_shape=jax.ShapeDtypeStruct((1, _LANE), jnp.float32),
        grid_spec=pltpu.PrefetchScalarGridSpec(
            num_scalar_prefetch=0,
            grid=(rows_p // block_rows,),
            in_specs=[pl.BlockSpec((block_rows, _LANE), lambda i: (i, 0)),
                      pl.BlockSpec((block_rows, _LANE), lambda i: (i, 0)),
                      pl.BlockSpec((block_rows, _LANE), lambda i: (i, 0))],
            out_specs=pl.BlockSpec((1, _LANE), lambda i: (0, 0)),
            scratch_shapes=[pltpu.VMEM((1, _LANE), jnp.float32)] * 3,
        ),
        compiler_params=pltpu.CompilerParams(dimension_semantics=("arbitrary",)),
    )(est2d, gt2d, msk2d)
    return out[0, 0]


# ----------------------------------------------------------------------------
# Module forward
# ----------------------------------------------------------------------------
def base_bev_depth_distill_forward(params, x, points=None, mats_dict=None,
                                   timestamps=None, is_train_depth=False,
                                   training=False):
    """Forward of BaseBEVDepth_Distill (teacher + student branches on shared input)."""
    preds_t, preds_s, x_t, x_s, depth_t, depth_s = _fused_forward(params, x)
    if is_train_depth and training:
        # TODO(synk): point-cloud voxelization branch (Voxelization / DynamicSimpleVFE /
        # PointPillarsScatter), view_mask / fine_d outputs and torch.save side effects need
        # the missing class sources; omitted.
        return preds_t, depth_t, x_t, preds_s, depth_s, x_s
    # torch.save(x_s, 'bev_feat.pt') omitted (file I/O side effect)
    return preds_t, preds_s, x_t, x_s


# ----------------------------------------------------------------------------
# Pure-JAX references (correctness checks only)
# ----------------------------------------------------------------------------
def _reference_forward(params, x):
    B, N, C, H, W = x.shape
    xf = x.astype(jnp.bfloat16).astype(jnp.float32)

    def branch(p):
        w_f = p["w_feat"].astype(jnp.bfloat16).astype(jnp.float32)
        w_d = p["w_depth"].astype(jnp.bfloat16).astype(jnp.float32)
        feat = jnp.einsum("bnchw,cf->bnfhw", xf, w_f) + p["b_feat"][None, None, :, None, None]
        logits = jnp.einsum("bnchw,cd->bndhw", xf, w_d) + p["b_depth"][None, None, :, None, None]
        return jnp.mean(feat, axis=1), jax.nn.softmax(logits, axis=2)

    def head(p, bev):
        bev_b = bev.astype(jnp.bfloat16).astype(jnp.float32)
        w_h = p["w_head"].astype(jnp.bfloat16).astype(jnp.float32)
        return jnp.einsum("bfhw,fk->bkhw", bev_b, w_h) + p["b_head"][None, :, None, None]

    bev_t, dep_t = branch(params["backbone_t"])
    bev_s, dep_s = branch(params["backbone_s"])
    pr_t = head(params["head_t"], bev_t)
    pr_s = head(params["head_s"], bev_s)
    return (pr_t, pr_s, bev_t, bev_s,
            dep_t.reshape(B * N, -1, H, W), dep_s.reshape(B * N, -1, H, W))


def _silog_reference(depth_est, depth_gt, mask):
    d = jnp.where(mask, jnp.log(depth_est) - jnp.log(depth_gt), 0.0)
    cnt = jnp.maximum(jnp.sum(mask.astype(jnp.float32)), 1.0)
    mean_d = jnp.sum(d) / cnt
    mean_d2 = jnp.sum(d * d) / cnt
    return jnp.sqrt(jnp.maximum(mean_d2 - VARIANCE_FOCUS * mean_d * mean_d, 0.0)) * 10.0


# ----------------------------------------------------------------------------
# Deterministic parameter init
# ----------------------------------------------------------------------------
def init_params(key, c_in, c_feat, d_bins, n_classes):
    def branch(k):
        k1, k2 = jax.random.split(k)
        return {
            "w_feat": jax.random.normal(k1, (c_in, c_feat), jnp.float32) * 0.1,
            "b_feat": jnp.zeros((c_feat,), jnp.float32),
            "w_depth": jax.random.normal(k2, (c_in, d_bins), jnp.float32) * 0.1,
            "b_depth": jnp.zeros((d_bins,), jnp.float32),
        }

    def head(k):
        return {
            "w_head": jax.random.normal(k, (c_feat, n_classes), jnp.float32) * 0.1,
            "b_head": jnp.zeros((n_classes,), jnp.float32),
        }

    kt, kts, kh, khs = jax.random.split(key, 4)
    return {"backbone_t": branch(kt), "head_t": head(kh),
            "backbone_s": branch(kts), "head_s": head(khs)}


# ----------------------------------------------------------------------------
# Main
# ----------------------------------------------------------------------------
if __name__ == "__main__":
    B, N_CAM, C_IN, H, W = 2, 2, 4, 16, 16
    C_FEAT, D_BINS, N_CLASSES = 32, 16, 8

    key = jax.random.PRNGKey(0)
    k_x, k_p, k_gt = jax.random.split(key, 3)

    x = jax.random.normal(k_x, (B, N_CAM, C_IN, H, W), jnp.float32)
    params = init_params(k_p, C_IN, C_FEAT, D_BINS, N_CLASSES)

    eye = jnp.broadcast_to(jnp.eye(4, dtype=jnp.float32), (B, 1, N_CAM, 4, 4))
    mats_dict = {
        "sensor2ego_mats": eye, "intrin_mats": eye, "ida_mats": eye,
        "sensor2sensor_mats": eye,
        "bda_mat": jnp.broadcast_to(jnp.eye(4, dtype=jnp.float32), (B, 4, 4)),
    }

    # Inference path: (preds_t, preds_s, x_t, x_s)
    preds_t, preds_s, x_t, x_s = base_bev_depth_distill_forward(
        params, x, points=None, mats_dict=mats_dict, timestamps=None,
        is_train_depth=False, training=False)

    # Training / distill path (returns depth predictions too)
    tr = base_bev_depth_distill_forward(
        params, x, points=None, mats_dict=mats_dict, timestamps=None,
        is_train_depth=True, training=True)
    depth_pred_t, depth_pred_s = tr[1], tr[4]

    # Exercise the silog_loss Pallas kernel on the (positive) depth softmax output.
    depth_est = depth_pred_t.astype(jnp.float32) + 1e-3
    depth_gt = jax.random.uniform(k_gt, depth_est.shape, jnp.float32, 0.5, 1.5)
    mask = (jnp.arange(depth_est.size).reshape(depth_est.shape) % 3) == 0
    loss = silog_loss_pallas(depth_est, depth_gt, mask)

    jax.block_until_ready((preds_t, preds_s, x_t, x_s, depth_pred_t, depth_pred_s, loss))

    # shape checks
    assert preds_t.shape == (B, N_CLASSES, H, W)
    assert preds_s.shape == (B, N_CLASSES, H, W)
    assert x_t.shape == (B, C_FEAT, H, W)
    assert x_s.shape == (B, C_FEAT, H, W)
    assert depth_pred_t.shape == (B * N_CAM, D_BINS, H, W)
    assert depth_pred_s.shape == (B * N_CAM, D_BINS, H, W)

    # numerical checks against pure-JAX references
    r_pt, r_ps, r_xt, r_xs, r_dt, r_ds = _reference_forward(params, x)
    for got, ref in ((preds_t, r_pt), (preds_s, r_ps), (x_t, r_xt), (x_s, r_xs),
                     (depth_pred_t, r_dt), (depth_pred_s, r_ds)):
        got32 = got.astype(jnp.float32)
        assert jnp.allclose(got32, ref, rtol=2e-2, atol=2e-2), float(jnp.max(jnp.abs(got32 - ref)))

    ref_loss = _silog_reference(depth_est, depth_gt, mask)
    assert bool(jnp.isfinite(loss))
    assert jnp.allclose(loss, ref_loss, rtol=1e-3, atol=1e-3), (float(loss), float(ref_loss))

    print("KERNEL_OK")
</pallas_src>

<mosaic_0001>
module attributes {stable_mosaic.version = 11 : i64} {
  func.func @kernel(%arg0: i32, %arg1: i32, %arg2: i32, %arg3: memref<1x1x4x256xbf16, #tpu.memory_space<vmem>>, %arg4: memref<96x4xbf16, #tpu.memory_space<vmem>>, %arg5: memref<96x1xf32, #tpu.memory_space<vmem>>, %arg6: memref<2x8x32xbf16, #tpu.memory_space<vmem>>, %arg7: memref<2x8x1xf32, #tpu.memory_space<vmem>>, %arg8: memref<1x1x16x256xbf16, #tpu.memory_space<vmem>>, %arg9: memref<1x1x16x256xbf16, #tpu.memory_space<vmem>>, %arg10: memref<1x32x256xbf16, #tpu.memory_space<vmem>>, %arg11: memref<1x32x256xbf16, #tpu.memory_space<vmem>>, %arg12: memref<1x8x256xf32, #tpu.memory_space<vmem>>, %arg13: memref<1x8x256xf32, #tpu.memory_space<vmem>>, %arg14: memref<32x256xf32, #tpu.memory_space<vmem>>, %arg15: memref<32x256xf32, #tpu.memory_space<vmem>>) attributes {dimension_semantics = [#tpu.dimension_semantics<parallel>, #tpu.dimension_semantics<parallel>, #tpu.dimension_semantics<arbitrary>], iteration_bounds = array<i64: 2, 1, 2>, scalar_prefetch = 0 : i64, scratch_operands = 2 : i64, tpu.core_type = #tpu.core_type<tc>, window_params = [{transform_indices = @transform_0, window_bounds = array<i64: 1, 1, 4, 256>}, {pipeline_mode = #tpu.pipeline_mode<synchronous>, transform_indices = @transform_1, window_bounds = array<i64: 96, 4>}, {pipeline_mode = #tpu.pipeline_mode<synchronous>, transform_indices = @transform_2, window_bounds = array<i64: 96, 1>}, {pipeline_mode = #tpu.pipeline_mode<synchronous>, transform_indices = @transform_3, window_bounds = array<i64: 2, 8, 32>}, {pipeline_mode = #tpu.pipeline_mode<synchronous>, transform_indices = @transform_4, window_bounds = array<i64: 2, 8, 1>}, {transform_indices = @transform_5, window_bounds = array<i64: 1, 1, 16, 256>}, {transform_indices = @transform_6, window_bounds = array<i64: 1, 1, 16, 256>}, {transform_indices = @transform_7, window_bounds = array<i64: 1, 32, 256>}, {transform_indices = @transform_8, window_bounds = array<i64: 1, 32, 256>}, {transform_indices = @transform_9, window_bounds = array<i64: 1, 8, 256>}, {transform_indices = @transform_10, window_bounds = array<i64: 1, 8, 256>}]} {
    %c0 = arith.constant 0 : index
    %c0_0 = arith.constant 0 : index
    %c0_1 = arith.constant 0 : index
    %c0_2 = arith.constant 0 : index
    %0 = vector.load %arg3[%c0, %c0_0, %c0_1, %c0_2] : memref<1x1x4x256xbf16, #tpu.memory_space<vmem>>, vector<1x1x4x256xbf16>
    %1 = vector.shape_cast %0 : vector<1x1x4x256xbf16> to vector<4x256xbf16>
    %c0_3 = arith.constant 0 : index
    %c0_4 = arith.constant 0 : index
    %2 = vector.load %arg4[%c0_3, %c0_4] : memref<96x4xbf16, #tpu.memory_space<vmem>>, vector<96x4xbf16>
    %cst = arith.constant dense<0.000000e+00> : vector<96x256xf32>
    %3 = tpu.matmul %2, %1, %cst {dimension_numbers = #tpu.dot_dimension_numbers<[1], [0], [0], [1], [0, 0, 1, 1], [], []>} : vector<96x4xbf16>, vector<4x256xbf16>, vector<96x256xf32> -> vector<96x256xf32>
    %c0_5 = arith.constant 0 : index
    %c0_6 = arith.constant 0 : index
    %4 = vector.load %arg5[%c0_5, %c0_6] : memref<96x1xf32, #tpu.memory_space<vmem>>, vector<96x1xf32>
    %5 = vector.broadcast %4 : vector<96x1xf32> to vector<96x256xf32>
    %6 = arith.addf %3, %5 : vector<96x256xf32>
    %7 = vector.extract_strided_slice %6 {offsets = [0, 0], sizes = [32, 256], strides = [1, 1]} : vector<96x256xf32> to vector<32x256xf32>
    %8 = vector.extract_strided_slice %6 {offsets = [32, 0], sizes = [32, 256], strides = [1, 1]} : vector<96x256xf32> to vector<32x256xf32>
    %9 = vector.extract_strided_slice %6 {offsets = [64, 0], sizes = [16, 256], strides = [1, 1]} : vector<96x256xf32> to vector<16x256xf32>
    %cst_7 = arith.constant dense<0xFF800000> : vector<256xf32>
    %10 = vector.multi_reduction <maximumf>, %9, %cst_7 [0] : vector<16x256xf32> to vector<256xf32>
    %11 = vector.shape_cast %10 : vector<256xf32> to vector<1x256xf32>
    %12 = vector.broadcast %11 : vector<1x256xf32> to vector<16x256xf32>
    %13 = arith.subf %9, %12 : vector<16x256xf32>
    %14 = math.exp %13 : vector<16x256xf32>
    %cst_8 = arith.constant dense<0.000000e+00> : vector<256xf32>
    %15 = vector.multi_reduction <add>, %14, %cst_8 [0] : vector<16x256xf32> to vector<256xf32>
    %16 = vector.shape_cast %15 : vector<256xf32> to vector<1x256xf32>
    %17 = tpu.reciprocal %16 {approx = true} : vector<1x256xf32> -> vector<1x256xf32>
    %18 = arith.mulf %16, %17 : vector<1x256xf32>
    %cst_9 = arith.constant 2.000000e+00 : f32
    %19 = vector.broadcast %cst_9 : f32 to vector<1x256xf32>
    %20 = arith.subf %19, %18 : vector<1x256xf32>
    %21 = arith.mulf %17, %20 : vector<1x256xf32>
    %22 = vector.broadcast %21 : vector<1x256xf32> to vector<16x256xf32>
    %23 = arith.mulf %14, %22 : vector<16x256xf32>
    %24 = arith.truncf %23 : vector<16x256xf32> to vector<16x256xbf16>
    %c0_10 = arith.constant 0 : index
    %c0_11 = arith.constant 0 : index
    %c0_12 = arith.constant 0 : index
    %c0_13 = arith.constant 0 : index
    %25 = vector.load %arg8[%c0_10, %c0_11, %c0_12, %c0_13] : memref<1x1x16x256xbf16, #tpu.memory_space<vmem>>, vector<1x1x16x256xbf16>
    %26 = vector.shape_cast %25 : vector<1x1x16x256xbf16> to vector<16x256xbf16>
    %27 = vector.shape_cast %24 : vector<16x256xbf16> to vector<1x1x16x256xbf16>
    tpu.vector_store %arg8[%c0_10, %c0_11, %c0_12, %c0_13], %27 {strides = array<i32>} : memref<1x1x16x256xbf16, #tpu.memory_space<vmem>>, vector<1x1x16x256xbf16>,
    %28 = vector.extract_strided_slice %6 {offsets = [80, 0], sizes = [16, 256], strides = [1, 1]} : vector<96x256xf32> to vector<16x256xf32>
    %cst_14 = arith.constant dense<0xFF800000> : vector<256xf32>
    %29 = vector.multi_reduction <maximumf>, %28, %cst_14 [0] : vector<16x256xf32> to vector<256xf32>
    %30 = vector.shape_cast %29 : vector<256xf32> to vector<1x256xf32>
    %31 = vector.broadcast %30 : vector<1x256xf32> to vector<16x256xf32>
    %32 = arith.subf %28, %31 : vector<16x256xf32>
    %33 = math.exp %32 : vector<16x256xf32>
    %cst_15 = arith.constant dense<0.000000e+00> : vector<256xf32>
    %34 = vector.multi_reduction <add>, %33, %cst_15 [0] : vector<16x256xf32> to vector<256xf32>
    %35 = vector.shape_cast %34 : vector<256xf32> to vector<1x256xf32>
    %36 = tpu.reciprocal %35 {approx = true} : vector<1x256xf32> -> vector<1x256xf32>
    %37 = arith.mulf %35, %36 : vector<1x256xf32>
    %cst_16 = arith.constant 2.000000e+00 : f32
    %38 = vector.broadcast %cst_16 : f32 to vector<1x256xf32>
    %39 = arith.subf %38, %37 : vector<1x256xf32>
    %40 = arith.mulf %36, %39 : vector<1x256xf32>
    %41 = vector.broadcast %40 : vector<1x256xf32> to vector<16x256xf32>
    %42 = arith.mulf %33, %41 : vector<16x256xf32>
    %43 = arith.truncf %42 : vector<16x256xf32> to vector<16x256xbf16>
    %c0_17 = arith.constant 0 : index
    %c0_18 = arith.constant 0 : index
    %c0_19 = arith.constant 0 : index
    %c0_20 = arith.constant 0 : index
    %44 = vector.load %arg9[%c0_17, %c0_18, %c0_19, %c0_20] : memref<1x1x16x256xbf16, #tpu.memory_space<vmem>>, vector<1x1x16x256xbf16>
    %45 = vector.shape_cast %44 : vector<1x1x16x256xbf16> to vector<16x256xbf16>
    %46 = vector.shape_cast %43 : vector<16x256xbf16> to vector<1x1x16x256xbf16>
    tpu.vector_store %arg9[%c0_17, %c0_18, %c0_19, %c0_20], %46 {strides = array<i32>} : memref<1x1x16x256xbf16, #tpu.memory_space<vmem>>, vector<1x1x16x256xbf16>,
    %c0_i32 = arith.constant 0 : i32
    %47 = arith.cmpi eq, %arg2, %c0_i32 : i32
    %48 = arith.extui %47 : i1 to i32
    %c0_i32_21 = arith.constant 0 : i32
    %49 = arith.cmpi ne, %48, %c0_i32_21 : i32
    scf.if %49 {
      %cst_31 = arith.constant 0.000000e+00 : f32
      %59 = vector.broadcast %cst_31 : f32 to vector<32x256xf32>
      %c0_32 = arith.constant 0 : index
      %c0_33 = arith.constant 0 : index
      %60 = vector.load %arg14[%c0_32, %c0_33] : memref<32x256xf32, #tpu.memory_space<vmem>>, vector<32x256xf32>
      tpu.vector_store %arg14[%c0_32, %c0_33], %59 {strides = array<i32>} : memref<32x256xf32, #tpu.memory_space<vmem>>, vector<32x256xf32>,
      %cst_34 = arith.constant 0.000000e+00 : f32
      %61 = vector.broadcast %cst_34 : f32 to vector<32x256xf32>
      %c0_35 = arith.constant 0 : index
      %c0_36 = arith.constant 0 : index
      %62 = vector.load %arg15[%c0_35, %c0_36] : memref<32x256xf32, #tpu.memory_space<vmem>>, vector<32x256xf32>
      tpu.vector_store %arg15[%c0_35, %c0_36], %61 {strides = array<i32>} : memref<32x256xf32, #tpu.memory_space<vmem>>, vector<32x256xf32>,
    } else {
    }
    %c0_22 = arith.constant 0 : index
    %c0_23 = arith.constant 0 : index
    %50 = vector.load %arg14[%c0_22, %c0_23] : memref<32x256xf32, #tpu.memory_space<vmem>>, vector<32x256xf32>
    %51 = arith.addf %50, %7 : vector<32x256xf32>
    %c0_24 = arith.constant 0 : index
    %c0_25 = arith.constant 0 : index
    %52 = vector.load %arg14[%c0_24, %c0_25] : memref<32x256xf32, #tpu.memory_space<vmem>>, vector<32x256xf32>
    tpu.vector_store %arg14[%c0_24, %c0_25], %51 {strides = array<i32>} : memref<32x256xf32, #tpu.memory_space<vmem>>, vector<32x256xf32>,
    %c0_26 = arith.constant 0 : index
    %c0_27 = arith.constant 0 : index
    %53 = vector.load %arg15[%c0_26, %c0_27] : memref<32x256xf32, #tpu.memory_space<vmem>>, vector<32x256xf32>
    %54 = arith.addf %53, %8 : vector<32x256xf32>
    %c0_28 = arith.constant 0 : index
    %c0_29 = arith.constant 0 : index
    %55 = vector.load %arg15[%c0_28, %c0_29] : memref<32x256xf32, #tpu.memory_space<vmem>>, vector<32x256xf32>
    tpu.vector_store %arg15[%c0_28, %c0_29], %54 {strides = array<i32>} : memref<32x256xf32, #tpu.memory_space<vmem>>, vector<32x256xf32>,
    %c1_i32 = arith.constant 1 : i32
    %56 = arith.cmpi eq, %arg2, %c1_i32 : i32
    %57 = arith.extui %56 : i1 to i32
    %c0_i32_30 = arith.constant 0 : i32
    %58 = arith.cmpi ne, %57, %c0_i32_30 : i32
    scf.if %58 {
      %c0_31 = arith.constant 0 : index
      %c0_32 = arith.constant 0 : index
      %59 = vector.load %arg14[%c0_31, %c0_32] : memref<32x256xf32, #tpu.memory_space<vmem>>, vector<32x256xf32>
      %cst_33 = arith.constant 5.000000e-01 : f32
      %60 = vector.broadcast %cst_33 : f32 to vector<32x256xf32>
      %61 = arith.mulf %59, %60 : vector<32x256xf32>
      %62 = arith.truncf %61 : vector<32x256xf32> to vector<32x256xbf16>
      %c0_34 = arith.constant 0 : index
      %c0_35 = arith.constant 0 : index
      %63 = vector.load %arg15[%c0_34, %c0_35] : memref<32x256xf32, #tpu.memory_space<vmem>>, vector<32x256xf32>
      %cst_36 = arith.constant 5.000000e-01 : f32
      %64 = vector.broadcast %cst_36 : f32 to vector<32x256xf32>
      %65 = arith.mulf %63, %64 : vector<32x256xf32>
      %66 = arith.truncf %65 : vector<32x256xf32> to vector<32x256xbf16>
      %c0_37 = arith.constant 0 : index
      %c0_38 = arith.constant 0 : index
      %c0_39 = arith.constant 0 : index
      %67 = vector.load %arg10[%c0_37, %c0_38, %c0_39] : memref<1x32x256xbf16, #tpu.memory_space<vmem>>, vector<1x32x256xbf16>
      %68 = vector.shape_cast %67 : vector<1x32x256xbf16> to vector<32x256xbf16>
      %69 = vector.shape_cast %62 : vector<32x256xbf16> to vector<1x32x256xbf16>
      tpu.vector_store %arg10[%c0_37, %c0_38, %c0_39], %69 {strides = array<i32>} : memref<1x32x256xbf16, #tpu.memory_space<vmem>>, vector<1x32x256xbf16>,
      %c0_40 = arith.constant 0 : index
      %c0_41 = arith.constant 0 : index
      %c0_42 = arith.constant 0 : index
      %70 = vector.load %arg11[%c0_40, %c0_41, %c0_42] : memref<1x32x256xbf16, #tpu.memory_space<vmem>>, vector<1x32x256xbf16>
      %71 = vector.shape_cast %70 : vector<1x32x256xbf16> to vector<32x256xbf16>
      %72 = vector.shape_cast %66 : vector<32x256xbf16> to vector<1x32x256xbf16>
      tpu.vector_store %arg11[%c0_40, %c0_41, %c0_42], %72 {strides = array<i32>} : memref<1x32x256xbf16, #tpu.memory_space<vmem>>, vector<1x32x256xbf16>,
      %c0_43 = arith.constant 0 : index
      %c0_44 = arith.constant 0 : index
      %c0_45 = arith.constant 0 : index
      %73 = vector.load %arg6[%c0_43, %c0_44, %c0_45] : memref<2x8x32xbf16, #tpu.memory_space<vmem>>, vector<1x8x32xbf16>
      %74 = vector.shape_cast %73 : vector<1x8x32xbf16> to vector<8x32xbf16>
      %cst_46 = arith.constant dense<0.000000e+00> : vector<8x256xf32>
      %75 = tpu.matmul %74, %62, %cst_46 {dimension_numbers = #tpu.dot_dimension_numbers<[1], [0], [0], [1], [0, 0, 1, 1], [], []>} : vector<8x32xbf16>, vector<32x256xbf16>, vector<8x256xf32> -> vector<8x256xf32>
      %c0_47 = arith.constant 0 : index
      %c0_48 = arith.constant 0 : index
      %c0_49 = arith.constant 0 : index
      %76 = vector.load %arg7[%c0_47, %c0_48, %c0_49] : memref<2x8x1xf32, #tpu.memory_space<vmem>>, vector<1x8x1xf32>
      %77 = vector.shape_cast %76 : vector<1x8x1xf32> to vector<8x1xf32>
      %78 = vector.broadcast %77 : vector<8x1xf32> to vector<8x256xf32>
      %79 = arith.addf %75, %78 : vector<8x256xf32>
      %c0_50 = arith.constant 0 : index
      %c0_51 = arith.constant 0 : index
      %c0_52 = arith.constant 0 : index
      %80 = vector.load %arg12[%c0_50, %c0_51, %c0_52] : memref<1x8x256xf32, #tpu.memory_space<vmem>>, vector<1x8x256xf32>
      %81 = vector.shape_cast %80 : vector<1x8x256xf32> to vector<8x256xf32>
      %82 = vector.shape_cast %79 : vector<8x256xf32> to vector<1x8x256xf32>
      tpu.vector_store %arg12[%c0_50, %c0_51, %c0_52], %82 {strides = array<i32>} : memref<1x8x256xf32, #tpu.memory_space<vmem>>, vector<1x8x256xf32>,
      %c1 = arith.constant 1 : index
      %c0_53 = arith.constant 0 : index
      %c0_54 = arith.constant 0 : index
      %83 = vector.load %arg6[%c1, %c0_53, %c0_54] : memref<2x8x32xbf16, #tpu.memory_space<vmem>>, vector<1x8x32xbf16>
      %84 = vector.shape_cast %83 : vector<1x8x32xbf16> to vector<8x32xbf16>
      %cst_55 = arith.constant dense<0.000000e+00> : vector<8x256xf32>
      %85 = tpu.matmul %84, %66, %cst_55 {dimension_numbers = #tpu.dot_dimension_numbers<[1], [0], [0], [1], [0, 0, 1, 1], [], []>} : vector<8x32xbf16>, vector<32x256xbf16>, vector<8x256xf32> -> vector<8x256xf32>
      %c1_56 = arith.constant 1 : index
      %c0_57 = arith.constant 0 : index
      %c0_58 = arith.constant 0 : index
      %86 = vector.load %arg7[%c1_56, %c0_57, %c0_58] : memref<2x8x1xf32, #tpu.memory_space<vmem>>, vector<1x8x1xf32>
      %87 = vector.shape_cast %86 : vector<1x8x1xf32> to vector<8x1xf32>
      %88 = vector.broadcast %87 : vector<8x1xf32> to vector<8x256xf32>
      %89 = arith.addf %85, %88 : vector<8x256xf32>
      %c0_59 = arith.constant 0 : index
      %c0_60 = arith.constant 0 : index
      %c0_61 = arith.constant 0 : index
      %90 = vector.load %arg13[%c0_59, %c0_60, %c0_61] : memref<1x8x256xf32, #tpu.memory_space<vmem>>, vector<1x8x256xf32>
      %91 = vector.shape_cast %90 : vector<1x8x256xf32> to vector<8x256xf32>
      %92 = vector.shape_cast %89 : vector<8x256xf32> to vector<1x8x256xf32>
      tpu.vector_store %arg13[%c0_59, %c0_60, %c0_61], %92 {strides = array<i32>} : memref<1x8x256xf32, #tpu.memory_space<vmem>>, vector<1x8x256xf32>,
    } else {
    }
    return
  }
  func.func @transform_0(%arg0: i32, %arg1: i32, %arg2: i32) -> (i32, i32, i32, i32) {
    %c0_i32 = arith.constant 0 : i32
    %c0_i32_0 = arith.constant 0 : i32
    return %arg2, %arg0, %c0_i32, %arg1 : i32, i32, i32, i32
  }
  func.func @transform_1(%arg0: i32, %arg1: i32, %arg2: i32) -> (i32, i32) {
    %c0_i32 = arith.constant 0 : i32
    %c0_i32_0 = arith.constant 0 : i32
    %c0_i32_1 = arith.constant 0 : i32
    return %c0_i32, %c0_i32_0 : i32, i32
  }
  func.func @transform_2(%arg0: i32, %arg1: i32, %arg2: i32) -> (i32, i32) {
    %c0_i32 = arith.constant 0 : i32
    %c0_i32_0 = arith.constant 0 : i32
    %c0_i32_1 = arith.constant 0 : i32
    return %c0_i32, %c0_i32_0 : i32, i32
  }
  func.func @transform_3(%arg0: i32, %arg1: i32, %arg2: i32) -> (i32, i32, i32) {
    %c0_i32 = arith.constant 0 : i32
    %c0_i32_0 = arith.constant 0 : i32
    %c0_i32_1 = arith.constant 0 : i32
    %c0_i32_2 = arith.constant 0 : i32
    return %c0_i32, %c0_i32_0, %c0_i32_1 : i32, i32, i32
  }
  func.func @transform_4(%arg0: i32, %arg1: i32, %arg2: i32) -> (i32, i32, i32) {
    %c0_i32 = arith.constant 0 : i32
    %c0_i32_0 = arith.constant 0 : i32
    %c0_i32_1 = arith.constant 0 : i32
    %c0_i32_2 = arith.constant 0 : i32
    return %c0_i32, %c0_i32_0, %c0_i32_1 : i32, i32, i32
  }
  func.func @transform_5(%arg0: i32, %arg1: i32, %arg2: i32) -> (i32, i32, i32, i32) {
    %c0_i32 = arith.constant 0 : i32
    %c0_i32_0 = arith.constant 0 : i32
    return %arg0, %arg2, %c0_i32, %arg1 : i32, i32, i32, i32
  }
  func.func @transform_6(%arg0: i32, %arg1: i32, %arg2: i32) -> (i32, i32, i32, i32) {
    %c0_i32 = arith.constant 0 : i32
    %c0_i32_0 = arith.constant 0 : i32
    return %arg0, %arg2, %c0_i32, %arg1 : i32, i32, i32, i32
  }
  func.func @transform_7(%arg0: i32, %arg1: i32, %arg2: i32) -> (i32, i32, i32) {
    %c0_i32 = arith.constant 0 : i32
    %c0_i32_0 = arith.constant 0 : i32
    return %arg0, %c0_i32, %arg1 : i32, i32, i32
  }
  func.func @transform_8(%arg0: i32, %arg1: i32, %arg2: i32) -> (i32, i32, i32) {
    %c0_i32 = arith.constant 0 : i32
    %c0_i32_0 = arith.constant 0 : i32
    return %arg0, %c0_i32, %arg1 : i32, i32, i32
  }
  func.func @transform_9(%arg0: i32, %arg1: i32, %arg2: i32) -> (i32, i32, i32) {
    %c0_i32 = arith.constant 0 : i32
    %c0_i32_0 = arith.constant 0 : i32
    return %arg0, %c0_i32, %arg1 : i32, i32, i32
  }
  func.func @transform_10(%arg0: i32, %arg1: i32, %arg2: i32) -> (i32, i32, i32) {
    %c0_i32 = arith.constant 0 : i32
    %c0_i32_0 = arith.constant 0 : i32
    return %arg0, %c0_i32, %arg1 : i32, i32, i32
  }
}

</mosaic_0001>

<llo_original>
// kernel: _fused_forward.1
$region0: #{_fused_forward.1}
  #allocation0 [shape = 'u32[]', space=smem, size = 0x4, offset = 0x4, fixed_abs, tag = 'smem constant byte address 0x4 - core index']
  #allocation1 [shape = 'u32[144,128]{1,0:T(1,128)}', space=vmem, size = 0x12000, scoped, tag = 'internal scratch']
  #allocation2 [shape = 'f32[32,256]{1,0:T(8,128)}', space=vmem, size = 0x8000, scoped, tag = 'scratch operand']
  #allocation3 [shape = 'f32[32,256]{1,0:T(8,128)}', space=vmem, size = 0x8000, scoped, tag = 'scratch operand']
  %s0 = inlined_call_operand.vmem [shape: bf16[2,2,4,256], index: 0, kind: input, shape index: {}]
  %s1 = inlined_call_operand.vmem [shape: bf16[96,4], index: 1, kind: input, shape index: {}]
  %s2 = inlined_call_operand.vmem [shape: f32[96,1], index: 2, kind: input, shape index: {}]
  %s3 = inlined_call_operand.vmem [shape: bf16[2,8,32], index: 3, kind: input, shape index: {}]
  %s4 = inlined_call_operand.vmem [shape: f32[2,8,1], index: 4, kind: input, shape index: {}]
  %s5 = inlined_call_operand.vmem [shape: bf16[2,2,16,256], index: 5, kind: output, shape index: {0}]
  %s6 = inlined_call_operand.vmem [shape: bf16[2,2,16,256], index: 6, kind: output, shape index: {1}]
  %s7 = inlined_call_operand.vmem [shape: bf16[2,32,256], index: 7, kind: output, shape index: {2}]
  %s8 = inlined_call_operand.vmem [shape: bf16[2,32,256], index: 8, kind: output, shape index: {3}]
  %s9 = inlined_call_operand.vmem [shape: f32[2,8,256], index: 9, kind: output, shape index: {4}]
  %s10 = inlined_call_operand.vmem [shape: f32[2,8,256], index: 10, kind: output, shape index: {5}]
  %11 = xla_tuple %s5, %s6, %s7, %s8, %s9, %s10
  %s12 = sld [smem:[#allocation0]]
  $region101: #{_fused_forward.1} parent=0
    _
  %s14 = ssub.s32 1, %s12
  %s15 = scalar_select 0, %s14, %s12
  loop: start=0, step=1, limit=6
  $region2: #{_fused_forward.1} parent=0 // loop_pre_header
    _
  $region3: #{_fused_forward.1} parent=0 // loop_header
    %s17 = sphi 0, %s21
    %p18 = scmp.ge.s32.totalorder %s17, 6
    %s24 = sphi 0, %s43
    %s25 = sphi 0, %s39
    %s26 = sphi 0, %s35
    %s27 = sphi 0, %s24
    %s28 = sphi 0, %s25
    %s29 = sphi 0, %s26
    %s30 = sphi 0, %s27
    %s31 = sphi 0, %s28
    %s32 = sphi 0, %s29
    %s50 = sphi 0, %s52
    %s53 = sphi 0, %s50
    %s54 = sphi 0, %s53
    %s70 = sphi 0, %s54
    %s74 = sphi 0, %s74
    %s76 = sphi 0, %s74
    %s77 = sphi 0, %s76
    %s91 = sphi 0, %s77
    %s95 = sphi 0, %s95
    %s97 = sphi 0, %s95
    %s98 = sphi 0, %s97
    %s112 = sphi 0, %s98
    %s116 = sphi 0, %s116
    %s118 = sphi 0, %s116
    %s119 = sphi 0, %s118
    %s133 = sphi 0, %s119
    %s137 = sphi 0, %s137
    %s139 = sphi 0, %s137
    %s140 = sphi 0, %s139
    %s154 = sphi 0, %s140
    %s164 = sphi 0, %s166
    %s167 = sphi 0, %s164
    %s168 = sphi 0, %s167
    %s184 = sphi 0, %s168
    %s194 = sphi 0, %s196
    %s197 = sphi 0, %s194
    %s198 = sphi 0, %s197
    %s214 = sphi 0, %s198
    %s222 = sphi 0, %s224
    %s225 = sphi 0, %s222
    %s226 = sphi 0, %s225
    %s242 = sphi 0, %s226
    %s250 = sphi 0, %s252
    %s253 = sphi 0, %s250
    %s254 = sphi 0, %s253
    %s270 = sphi 0, %s254
    %s278 = sphi 0, %s280
    %s281 = sphi 0, %s278
    %s282 = sphi 0, %s281
    %s298 = sphi 0, %s282
    %s306 = sphi 0, %s308
    %s309 = sphi 0, %s306
    %s310 = sphi 0, %s309
    %s326 = sphi 0, %s310
  $region4: #{_fused_forward.1} parent=0 // loop_header_branch
    %20 = sbr.rel (%p18) target = $region8
  $region5: #{_fused_forward.1} parent=0 // loop_body
    %s22 = ssub.s32 %s17, 1
    %s23 = ssub.s32 %s17, 2
    %s33 = sadd.s32 1, %s26
    %p34 = scmp.ge.s32.totalorder %s33, 2
    %s35 = scalar_select %p34, 0, %s33
    %s36 = sadd.s32 1, %s25
    %s37 = scalar_select %p34, %s36, %s25
    %p38 = scmp.ge.s32.totalorder %s37, 1
    %s39 = scalar_select %p38, 0, %s37
    %s40 = sadd.s32 1, %s24
    %s41 = scalar_select %p38, %s40, %s24
    %p42 = scmp.ge.s32.totalorder %s41, 2
    %s43 = scalar_select %p42, 0, %s41
    %s44 = ssub.s32 %s26, %s35
    %s45 = ssub.s32 %s24, %s43
    %s46 = sor.u32 %s44, %s45
    %s47 = ssub.s32 %s25, %s39
    %s48 = sor.u32 %s46, %s47
    %p49 = scmp.eq.s32.totalorder %s48, 0
    %s51 = sadd.s32 %s50, 1
    %s52 = scalar_select %p49, %s50, %s51
    %p55 = pneg %p49
    %p56 = scmp.eq.s32.totalorder %s17, 3
    %p57 = por %p55, %p56
    %p58 = scmp.ne.s32.totalorder %s50, %s53
    %p59 = scmp.eq.s32.totalorder %s17, 0
    %p60 = por %p58, %p59
    %p61 = scmp.ne.s32.totalorder %s50, %s53
    %p62 = scmp.eq.s32.totalorder %s22, 3
    %p63 = por %p61, %p62
    %p64 = scmp.ne.s32.totalorder %s53, %s54
    %p65 = scmp.eq.s32.totalorder %s22, 0
    %p66 = por %p64, %p65
    %p67 = scmp.ne.s32.totalorder %s53, %s54
    %p68 = scmp.eq.s32.totalorder %s23, 3
    %p69 = por %p67, %p68
    %p71 = scmp.ne.s32.totalorder %s54, %s70
    %p72 = scmp.eq.s32.totalorder %s23, 0
    %p73 = por %p71, %p72
    %s75 = sadd.s32 %s74, 1
    %p78 = scmp.eq.s32.totalorder %s17, 3
    %p79 = scmp.ne.s32.totalorder %s74, %s76
    %p80 = scmp.eq.s32.totalorder %s17, 0
    %p81 = por %p79, %p80
    %p82 = scmp.ne.s32.totalorder %s74, %s76
    %p83 = scmp.eq.s32.totalorder %s22, 3
    %p84 = por %p82, %p83
    %p85 = scmp.ne.s32.totalorder %s76, %s77
    %p86 = scmp.eq.s32.totalorder %s22, 0
    %p87 = por %p85, %p86
    %p88 = scmp.ne.s32.totalorder %s76, %s77
    %p89 = scmp.eq.s32.totalorder %s23, 3
    %p90 = por %p88, %p89
    %p92 = scmp.ne.s32.totalorder %s77, %s91
    %p93 = scmp.eq.s32.totalorder %s23, 0
    %p94 = por %p92, %p93
    %s96 = sadd.s32 %s95, 1
    %p99 = scmp.eq.s32.totalorder %s17, 3
    %p100 = scmp.ne.s32.totalorder %s95, %s97
    %p101 = scmp.eq.s32.totalorder %s17, 0
    %p102 = por %p100, %p101
    %p103 = scmp.ne.s32.totalorder %s95, %s97
    %p104 = scmp.eq.s32.totalorder %s22, 3
    %p105 = por %p103, %p104
    %p106 = scmp.ne.s32.totalorder %s97, %s98
    %p107 = scmp.eq.s32.totalorder %s22, 0
    %p108 = por %p106, %p107
    %p109 = scmp.ne.s32.totalorder %s97, %s98
    %p110 = scmp.eq.s32.totalorder %s23, 3
    %p111 = por %p109, %p110
    %p113 = scmp.ne.s32.totalorder %s98, %s112
    %p114 = scmp.eq.s32.totalorder %s23, 0
    %p115 = por %p113, %p114
    %s117 = sadd.s32 %s116, 1
    %p120 = scmp.eq.s32.totalorder %s17, 3
    %p121 = scmp.ne.s32.totalorder %s116, %s118
    %p122 = scmp.eq.s32.totalorder %s17, 0
    %p123 = por %p121, %p122
    %p124 = scmp.ne.s32.totalorder %s116, %s118
    %p125 = scmp.eq.s32.totalorder %s22, 3
    %p126 = por %p124, %p125
    %p127 = scmp.ne.s32.totalorder %s118, %s119
    %p128 = scmp.eq.s32.totalorder %s22, 0
    %p129 = por %p127, %p128
    %p130 = scmp.ne.s32.totalorder %s118, %s119
    %p131 = scmp.eq.s32.totalorder %s23, 3
    %p132 = por %p130, %p131
    %p134 = scmp.ne.s32.totalorder %s119, %s133
    %p135 = scmp.eq.s32.totalorder %s23, 0
    %p136 = por %p134, %p135
    %s138 = sadd.s32 %s137, 1
    %p141 = scmp.eq.s32.totalorder %s17, 3
    %p142 = scmp.ne.s32.totalorder %s137, %s139
    %p143 = scmp.eq.s32.totalorder %s17, 0
    %p144 = por %p142, %p143
    %p145 = scmp.ne.s32.totalorder %s137, %s139
    %p146 = scmp.eq.s32.totalorder %s22, 3
    %p147 = por %p145, %p146
    %p148 = scmp.ne.s32.totalorder %s139, %s140
    %p149 = scmp.eq.s32.totalorder %s22, 0
    %p150 = por %p148, %p149
    %p151 = scmp.ne.s32.totalorder %s139, %s140
    %p152 = scmp.eq.s32.totalorder %s23, 3
    %p153 = por %p151, %p152
    %p155 = scmp.ne.s32.totalorder %s140, %s154
    %p156 = scmp.eq.s32.totalorder %s23, 0
    %p157 = por %p155, %p156
    %s158 = ssub.s32 %s24, %s43
    %s159 = ssub.s32 %s26, %s35
    %s160 = sor.u32 %s158, %s159
    %s161 = ssub.s32 %s25, %s39
    %s162 = sor.u32 %s160, %s161
    %p163 = scmp.eq.s32.totalorder %s162, 0
    %s165 = sadd.s32 %s164, 1
    %s166 = scalar_select %p163, %s164, %s165
    %p169 = pneg %p163
    %p170 = scmp.eq.s32.totalorder %s17, 3
    %p171 = por %p169, %p170
    %p172 = scmp.ne.s32.totalorder %s164, %s167
    %p173 = scmp.eq.s32.totalorder %s17, 0
    %p174 = por %p172, %p173
    %p175 = scmp.ne.s32.totalorder %s164, %s167
    %p176 = scmp.eq.s32.totalorder %s22, 3
    %p177 = por %p175, %p176
    %p178 = scmp.ne.s32.totalorder %s167, %s168
    %p179 = scmp.eq.s32.totalorder %s22, 0
    %p180 = por %p178, %p179
    %p181 = scmp.ne.s32.totalorder %s167, %s168
    %p182 = scmp.eq.s32.totalorder %s23, 3
    %p183 = por %p181, %p182
    %p185 = scmp.ne.s32.totalorder %s168, %s184
    %p186 = scmp.eq.s32.totalorder %s23, 0
    %p187 = por %p185, %p186
    %s188 = ssub.s32 %s24, %s43
    %s189 = ssub.s32 %s26, %s35
    %s190 = sor.u32 %s188, %s189
    %s191 = ssub.s32 %s25, %s39
    %s192 = sor.u32 %s190, %s191
    %p193 = scmp.eq.s32.totalorder %s192, 0
    %s195 = sadd.s32 %s194, 1
    %s196 = scalar_select %p193, %s194, %s195
    %p199 = pneg %p193
    %p200 = scmp.eq.s32.totalorder %s17, 3
    %p201 = por %p199, %p200
    %p202 = scmp.ne.s32.totalorder %s194, %s197
    %p203 = scmp.eq.s32.totalorder %s17, 0
    %p204 = por %p202, %p203
    %p205 = scmp.ne.s32.totalorder %s194, %s197
    %p206 = scmp.eq.s32.totalorder %s22, 3
    %p207 = por %p205, %p206
    %p208 = scmp.ne.s32.totalorder %s197, %s198
    %p209 = scmp.eq.s32.totalorder %s22, 0
    %p210 = por %p208, %p209
    %p211 = scmp.ne.s32.totalorder %s197, %s198
    %p212 = scmp.eq.s32.totalorder %s23, 3
    %p213 = por %p211, %p212
    %p215 = scmp.ne.s32.totalorder %s198, %s214
    %p216 = scmp.eq.s32.totalorder %s23, 0
    %p217 = por %p215, %p216
    %s218 = ssub.s32 %s24, %s43
    %s219 = ssub.s32 %s25, %s39
    %s220 = sor.u32 %s218, %s219
    %p221 = scmp.eq.s32.totalorder %s220, 0
    %s223 = sadd.s32 %s222, 1
    %s224 = scalar_select %p221, %s222, %s223
    %p227 = pneg %p221
    %p228 = scmp.eq.s32.totalorder %s17, 3
    %p229 = por %p227, %p228
    %p230 = scmp.ne.s32.totalorder %s222, %s225
    %p231 = scmp.eq.s32.totalorder %s17, 0
    %p232 = por %p230, %p231
    %p233 = scmp.ne.s32.totalorder %s222, %s225
    %p234 = scmp.eq.s32.totalorder %s22, 3
    %p235 = por %p233, %p234
    %p236 = scmp.ne.s32.totalorder %s225, %s226
    %p237 = scmp.eq.s32.totalorder %s22, 0
    %p238 = por %p236, %p237
    %p239 = scmp.ne.s32.totalorder %s225, %s226
    %p240 = scmp.eq.s32.totalorder %s23, 3
    %p241 = por %p239, %p240
    %p243 = scmp.ne.s32.totalorder %s226, %s242
    %p244 = scmp.eq.s32.totalorder %s23, 0
    %p245 = por %p243, %p244
    %s246 = ssub.s32 %s24, %s43
    %s247 = ssub.s32 %s25, %s39
    %s248 = sor.u32 %s246, %s247
    %p249 = scmp.eq.s32.totalorder %s248, 0
    %s251 = sadd.s32 %s250, 1
    %s252 = scalar_select %p249, %s250, %s251
    %p255 = pneg %p249
    %p256 = scmp.eq.s32.totalorder %s17, 3
    %p257 = por %p255, %p256
    %p258 = scmp.ne.s32.totalorder %s250, %s253
    %p259 = scmp.eq.s32.totalorder %s17, 0
    %p260 = por %p258, %p259
    %p261 = scmp.ne.s32.totalorder %s250, %s253
    %p262 = scmp.eq.s32.totalorder %s22, 3
    %p263 = por %p261, %p262
    %p264 = scmp.ne.s32.totalorder %s253, %s254
    %p265 = scmp.eq.s32.totalorder %s22, 0
    %p266 = por %p264, %p265
    %p267 = scmp.ne.s32.totalorder %s253, %s254
    %p268 = scmp.eq.s32.totalorder %s23, 3
    %p269 = por %p267, %p268
    %p271 = scmp.ne.s32.totalorder %s254, %s270
    %p272 = scmp.eq.s32.totalorder %s23, 0
    %p273 = por %p271, %p272
    %s274 = ssub.s32 %s24, %s43
    %s275 = ssub.s32 %s25, %s39
    %s276 = sor.u32 %s274, %s275
    %p277 = scmp.eq.s32.totalorder %s276, 0
    %s279 = sadd.s32 %s278, 1
    %s280 = scalar_select %p277, %s278, %s279
    %p283 = pneg %p277
    %p284 = scmp.eq.s32.totalorder %s17, 3
    %p285 = por %p283, %p284
    %p286 = scmp.ne.s32.totalorder %s278, %s281
    %p287 = scmp.eq.s32.totalorder %s17, 0
    %p288 = por %p286, %p287
    %p289 = scmp.ne.s32.totalorder %s278, %s281
    %p290 = scmp.eq.s32.totalorder %s22, 3
    %p291 = por %p289, %p290
    %p292 = scmp.ne.s32.totalorder %s281, %s282
    %p293 = scmp.eq.s32.totalorder %s22, 0
    %p294 = por %p292, %p293
    %p295 = scmp.ne.s32.totalorder %s281, %s282
    %p296 = scmp.eq.s32.totalorder %s23, 3
    %p297 = por %p295, %p296
    %p299 = scmp.ne.s32.totalorder %s282, %s298
    %p300 = scmp.eq.s32.totalorder %s23, 0
    %p301 = por %p299, %p300
    %s302 = ssub.s32 %s24, %s43
    %s303 = ssub.s32 %s25, %s39
    %s304 = sor.u32 %s302, %s303
    %p305 = scmp.eq.s32.totalorder %s304, 0
    %s307 = sadd.s32 %s306, 1
    %s308 = scalar_select %p305, %s306, %s307
    %p311 = pneg %p305
    %p312 = scmp.eq.s32.totalorder %s17, 3
    %p313 = por %p311, %p312
    %p314 = scmp.ne.s32.totalorder %s306, %s309
    %p315 = scmp.eq.s32.totalorder %s17, 0
    %p316 = por %p314, %p315
    %p317 = scmp.ne.s32.totalorder %s306, %s309
    %p318 = scmp.eq.s32.totalorder %s22, 3
    %p319 = por %p317, %p318
    %p320 = scmp.ne.s32.totalorder %s309, %s310
    %p321 = scmp.eq.s32.totalorder %s22, 0
    %p322 = por %p320, %p321
    %p323 = scmp.ne.s32.totalorder %s309, %s310
    %p324 = scmp.eq.s32.totalorder %s23, 3
    %p325 = por %p323, %p324
    %p327 = scmp.ne.s32.totalorder %s310, %s326
    %p328 = scmp.eq.s32.totalorder %s23, 0
    %p329 = por %p327, %p328
    %p330 = scmp.le.s32.totalorder 1, %s17
    %p331 = scmp.lt.s32.totalorder %s17, 5
    %p332 = pnand %p330, %p331
    %p333 = pneg %p332
    // Predicated region
    $region9: #{_fused_forward.1} parent=5 // pred_check
      _
    $region10: #{_fused_forward.1} parent=5 // pred_check_branch
      %335 = sbr.rel (%p332) target = $region12
    $region11: #{_fused_forward.1} parent=5 // pred_region
      %s336 = ssub.s32 %s17, 1
      // Predicated region
      $region13: #{_fused_forward.1} parent=11 // pred_check
        %p337 = pneg %p87
      $region14: #{_fused_forward.1} parent=11 // pred_check_branch
        %339 = sbr.rel (%p337) target = $region16
      $region15: #{_fused_forward.1} parent=11 // pred_region
        _
      $region16: #{_fused_forward.1} parent=11 // pred_fallthru
        _
      // Predicated region
      $region17: #{_fused_forward.1} parent=11 // pred_check
        %p340 = pneg %p108
      $region18: #{_fused_forward.1} parent=11 // pred_check_branch
        %342 = sbr.rel (%p340) target = $region20
      $region19: #{_fused_forward.1} parent=11 // pred_region
        _
      $region20: #{_fused_forward.1} parent=11 // pred_fallthru
        _
      // Predicated region
      $region21: #{_fused_forward.1} parent=11 // pred_check
        %p343 = pneg %p129
      $region22: #{_fused_forward.1} parent=11 // pred_check_branch
        %345 = sbr.rel (%p343) target = $region24
      $region23: #{_fused_forward.1} parent=11 // pred_region
        _
      $region24: #{_fused_forward.1} parent=11 // pred_fallthru
        _
      // Predicated region
      $region25: #{_fused_forward.1} parent=11 // pred_check
        %p346 = pneg %p150
      $region26: #{_fused_forward.1} parent=11 // pred_check_branch
        %348 = sbr.rel (%p346) target = $region28
      $region27: #{_fused_forward.1} parent=11 // pred_region
        _
      $region28: #{_fused_forward.1} parent=11 // pred_fallthru
        _
    $region12: #{_fused_forward.1} parent=5 // pred_fallthru
      _
    %p349 = scmp.lt.s32.totalorder %s17, 4
    // Predicated region
    $region29: #{_fused_forward.1} parent=5 // pred_check
      %p350 = pneg %p349
    $region30: #{_fused_forward.1} parent=5 // pred_check_branch
      %352 = sbr.rel (%p350) target = $region32
    $region31: #{_fused_forward.1} parent=5 // pred_region
      // Predicated region
      $region33: #{_fused_forward.1} parent=31 // pred_check
        %p353 = pneg %p60
      $region34: #{_fused_forward.1} parent=31 // pred_check_branch
        %355 = sbr.rel (%p353) target = $region36
      $region35: #{_fused_forward.1} parent=31 // pred_region
        %s356 = smul.u32 2, %s25
        %p357 = scmp.lt.s32.totalorder %s26, 1
        %s358 = scalar_select %p357, %s26, 1
        %p359 = scmp.lt.s32.totalorder %s24, 1
        %s360 = scalar_select %p359, %s24, 1
        %p361 = scmp.lt.s32.totalorder %s356, 1
        %s362 = scalar_select %p361, %s356, 1
        %s363 = smul.addr %s360, 2
        %s364 = sadd.s32 %s362, %s363
        %s365 = smul.addr %s358, 4
        %s366 = sadd.s32 %s364, %s365
        %s367 = smul.addr %s366, 2
        %s368 = scalar_lea.vmem %s0, %s367
        %s369 = smul.u32 2, %s25
      $region36: #{_fused_forward.1} parent=31 // pred_fallthru
        _
    $region32: #{_fused_forward.1} parent=5 // pred_fallthru
      _
    %p370 = scmp.le.s32.totalorder 1, %s17
    %p371 = scmp.lt.s32.totalorder %s17, 5
    %p372 = pnand %p370, %p371
    %p373 = pneg %p372
    // Predicated region
    $region37: #{_fused_forward.1} parent=5 // pred_check
      _
    $region38: #{_fused_forward.1} parent=5 // pred_check_branch
      %375 = sbr.rel (%p372) target = $region40
    $region39: #{_fused_forward.1} parent=5 // pred_region
      %s376 = ssub.s32 %s17, 1
      %s377 = smul.u32 2, %s28
      %p378 = scmp.lt.s32.totalorder %s29, 1
      %s379 = scalar_select %p378, %s29, 1
      %p380 = scmp.lt.s32.totalorder %s27, 1
      %s381 = scalar_select %p380, %s27, 1
      %p382 = scmp.lt.s32.totalorder %s377, 1
      %s383 = scalar_select %p382, %s377, 1
      %s384 = smul.addr %s381, 2
      %s385 = sadd.s32 %s383, %s384
      %s386 = smul.addr %s379, 4
      %s387 = sadd.s32 %s385, %s386
      %s388 = smul.addr %s387, 2
      %s389 = scalar_lea.vmem %s0, %s388
      %p390 = pneg %p66
      %p391 = pneg %p63
      %p392 = pneg %p87
      %p393 = pneg %p84
      %p394 = pneg %p108
      %p395 = pneg %p105
      %p396 = pneg %p129
      %p397 = pneg %p126
      %p398 = pneg %p150
      %p399 = pneg %p147
      %p400 = pneg %p180
      %p401 = pneg %p177
      %s402 = smul.u32 2, %s28
      %p403 = scmp.lt.s32.totalorder %s27, 1
      %s404 = scalar_select %p403, %s27, 1
      %p405 = scmp.lt.s32.totalorder %s29, 1
      %s406 = scalar_select %p405, %s29, 1
      %p407 = scmp.lt.s32.totalorder %s402, 1
      %s408 = scalar_select %p407, %s402, 1
      %s409 = smul.addr %s406, 4
      %s410 = sadd.s32 %s408, %s409
      %s411 = smul.addr %s404, 8
      %s412 = sadd.s32 %s410, %s411
      %s413 = smul.addr %s412, 4
      %s414 = scalar_lea.vmem %s5, %s413
      %p415 = pneg %p210
      %p416 = pneg %p207
      %s417 = smul.u32 2, %s28
      %p418 = scmp.lt.s32.totalorder %s27, 1
      %s419 = scalar_select %p418, %s27, 1
      %p420 = scmp.lt.s32.totalorder %s29, 1
      %s421 = scalar_select %p420, %s29, 1
      %p422 = scmp.lt.s32.totalorder %s417, 1
      %s423 = scalar_select %p422, %s417, 1
      %s424 = smul.addr %s421, 4
      %s425 = sadd.s32 %s423, %s424
      %s426 = smul.addr %s419, 8
      %s427 = sadd.s32 %s425, %s426
      %s428 = smul.addr %s427, 4
      %s429 = scalar_lea.vmem %s6, %s428
      %p430 = pneg %p238
      %p431 = pneg %p235
      %s432 = smul.u32 2, %s28
      %p433 = scmp.lt.s32.totalorder %s27, 1
      %s434 = scalar_select %p433, %s27, 1
      %p435 = scmp.lt.s32.totalorder %s432, 1
      %s436 = scalar_select %p435, %s432, 1
      %s437 = smul.addr %s434, 8
      %s438 = sadd.s32 %s436, %s437
      %s439 = smul.addr %s438, 4
      %s440 = scalar_lea.vmem %s7, %s439
      %p441 = pneg %p266
      %p442 = pneg %p263
      %s443 = smul.u32 2, %s28
      %p444 = scmp.lt.s32.totalorder %s27, 1
      %s445 = scalar_select %p444, %s27, 1
      %p446 = scmp.lt.s32.totalorder %s443, 1
      %s447 = scalar_select %p446, %s443, 1
      %s448 = smul.addr %s445, 8
      %s449 = sadd.s32 %s447, %s448
      %s450 = smul.addr %s449, 4
      %s451 = scalar_lea.vmem %s8, %s450
      %p452 = pneg %p294
      %p453 = pneg %p291
      %s454 = smul.u32 2, %s28
      %p455 = scmp.lt.s32.totalorder %s27, 1
      %s456 = scalar_select %p455, %s27, 1
      %p457 = scmp.lt.s32.totalorder %s454, 1
      %s458 = scalar_select %p457, %s454, 1
      %s459 = smul.addr %s456, 2
      %s460 = sadd.s32 %s458, %s459
      %s461 = smul.addr %s460, 8
      %s462 = scalar_lea.vmem %s9, %s461
      %p463 = pneg %p322
      %p464 = pneg %p319
      %s465 = smul.u32 2, %s28
      %p466 = scmp.lt.s32.totalorder %s27, 1
      %s467 = scalar_select %p466, %s27, 1
      %p468 = scmp.lt.s32.totalorder %s465, 1
      %s469 = scalar_select %p468, %s465, 1
      %s470 = smul.addr %s467, 2
      %s471 = sadd.s32 %s469, %s470
      %s472 = smul.addr %s471, 8
      %s473 = scalar_lea.vmem %s10, %s472
      %s474 = smul.u32 2, %s28
      %p475 = scmp.lt.s32.totalorder %s29, 1
      %s476 = scalar_select %p475, %s29, 1
      %p477 = scmp.lt.s32.totalorder %s27, 1
      %s478 = scalar_select %p477, %s27, 1
      %p479 = scmp.lt.s32.totalorder %s474, 1
      %s480 = scalar_select %p479, %s474, 1
      %s481 = smul.addr %s478, 2
      %s482 = sadd.s32 %s480, %s481
      %s483 = smul.addr %s476, 4
      %s484 = sadd.s32 %s482, %s483
      %s485 = smul.addr %s484, 2
      %s486 = scalar_lea.vmem %s0, %s485
      %s487 = smul.u32 2, %s28
      %s488 = smul.u32 2, %s28
      %p489 = scmp.lt.s32.totalorder %s27, 1
      %s490 = scalar_select %p489, %s27, 1
      %p491 = scmp.lt.s32.totalorder %s29, 1
      %s492 = scalar_select %p491, %s29, 1
      %p493 = scmp.lt.s32.totalorder %s488, 1
      %s494 = scalar_select %p493, %s488, 1
      %s495 = smul.addr %s492, 4
      %s496 = sadd.s32 %s494, %s495
      %s497 = smul.addr %s490, 8
      %s498 = sadd.s32 %s496, %s497
      %s499 = smul.addr %s498, 4
      %s500 = scalar_lea.vmem %s5, %s499
      %s501 = smul.u32 2, %s28
      %s502 = smul.u32 2, %s28
      %p503 = scmp.lt.s32.totalorder %s27, 1
      %s504 = scalar_select %p503, %s27, 1
      %p505 = scmp.lt.s32.totalorder %s29, 1
      %s506 = scalar_select %p505, %s29, 1
      %p507 = scmp.lt.s32.totalorder %s502, 1
      %s508 = scalar_select %p507, %s502, 1
      %s509 = smul.addr %s506, 4
      %s510 = sadd.s32 %s508, %s509
      %s511 = smul.addr %s504, 8
      %s512 = sadd.s32 %s510, %s511
      %s513 = smul.addr %s512, 4
      %s514 = scalar_lea.vmem %s6, %s513
      %s515 = smul.u32 2, %s28
      %s516 = smul.u32 2, %s28
      %p517 = scmp.lt.s32.totalorder %s27, 1
      %s518 = scalar_select %p517, %s27, 1
      %p519 = scmp.lt.s32.totalorder %s516, 1
      %s520 = scalar_select %p519, %s516, 1
      %s521 = smul.addr %s518, 8
      %s522 = sadd.s32 %s520, %s521
      %s523 = smul.addr %s522, 4
      %s524 = scalar_lea.vmem %s7, %s523
      %s525 = smul.u32 2, %s28
      %s526 = smul.u32 2, %s28
      %p527 = scmp.lt.s32.totalorder %s27, 1
      %s528 = scalar_select %p527, %s27, 1
      %p529 = scmp.lt.s32.totalorder %s526, 1
      %s530 = scalar_select %p529, %s526, 1
      %s531 = smul.addr %s528, 8
      %s532 = sadd.s32 %s530, %s531
      %s533 = smul.addr %s532, 4
      %s534 = scalar_lea.vmem %s8, %s533
      %s535 = smul.u32 2, %s28
      %s536 = smul.u32 2, %s28
      %p537 = scmp.lt.s32.totalorder %s27, 1
      %s538 = scalar_select %p537, %s27, 1
      %p539 = scmp.lt.s32.totalorder %s536, 1
      %s540 = scalar_select %p539, %s536, 1
      %s541 = smul.addr %s538, 2
      %s542 = sadd.s32 %s540, %s541
      %s543 = smul.addr %s542, 8
      %s544 = scalar_lea.vmem %s9, %s543
      %s545 = smul.u32 2, %s28
      %s546 = smul.u32 2, %s28
      %p547 = scmp.lt.s32.totalorder %s27, 1
      %s548 = scalar_select %p547, %s27, 1
      %p549 = scmp.lt.s32.totalorder %s546, 1
      %s550 = scalar_select %p549, %s546, 1
      %s551 = smul.addr %s548, 2
      %s552 = sadd.s32 %s550, %s551
      %s553 = smul.addr %s552, 8
      %s554 = scalar_lea.vmem %s10, %s553
      %s555 = smul.u32 2, %s28
      %v557 = vld [vmem:[%s486] sm:$0xf]
      %v558 = vld [vmem:[%s1] sm:$0xf]
      %v559 = vld [vmem:[%s1 + $0x4] sm:$0xf]
      %v560 = vld [vmem:[%s1 + $0x8] sm:$0xf]
      %v561 = vld [vmem:[%s1 + $0xc] sm:$0xf]
      %v562 = vld [vmem:[%s1 + $0x10] sm:$0xf]
      %v563 = vld [vmem:[%s1 + $0x14] sm:$0xf]
      %v564 = vld [vmem:[%s1 + $0x18] sm:$0xf]
      %v565 = vld [vmem:[%s1 + $0x1c] sm:$0xf]
      %v566 = vld [vmem:[%s1 + $0x20] sm:$0xf]
      %v567 = vld [vmem:[%s1 + $0x24] sm:$0xf]
      %v568 = vld [vmem:[%s1 + $0x28] sm:$0xf]
      %v569 = vld [vmem:[%s1 + $0x2c] sm:$0xf]
      %v570 = vld [vmem:[%s2] sm:$0xff]
      %v571 = vld [vmem:[%s2 + $0x8] sm:$0xff]
      %v572 = vld [vmem:[%s2 + $0x10] sm:$0xff]
      %v573 = vld [vmem:[%s2 + $0x18] sm:$0xff]
      %v574 = vld [vmem:[%s2 + $0x20] sm:$0xff]
      %v575 = vld [vmem:[%s2 + $0x28] sm:$0xff]
      %v576 = vld [vmem:[%s2 + $0x30] sm:$0xff]
      %v577 = vld [vmem:[%s2 + $0x38] sm:$0xff]
      %v578 = vld [vmem:[%s2 + $0x40] sm:$0xff]
      %v579 = vld [vmem:[%s2 + $0x48] sm:$0xff]
      %v580 = vld [vmem:[%s2 + $0x50] sm:$0xff]
      %v581 = vld [vmem:[%s2 + $0x58] sm:$0xff]
      %583 = vset.pattern.permute.xlu0 0
      %584 = vperm.xlu0 %583, %v570
      %v585 = vpop.permute.xlu0 %584
      %588 = vset.pattern.permute.xlu0 0
      %589 = vperm.xlu0 %588, %v571
      %v590 = vpop.permute.xlu0 %589
      %593 = vset.pattern.permute.xlu0 0
      %594 = vperm.xlu0 %593, %v572
      %v595 = vpop.permute.xlu0 %594
      %598 = vset.pattern.permute.xlu0 0
      %599 = vperm.xlu0 %598, %v573
      %v600 = vpop.permute.xlu0 %599
      %603 = vset.pattern.permute.xlu0 0
      %604 = vperm.xlu0 %603, %v574
      %v605 = vpop.permute.xlu0 %604
      %608 = vset.pattern.permute.xlu0 0
      %609 = vperm.xlu0 %608, %v575
      %v610 = vpop.permute.xlu0 %609
      %613 = vset.pattern.permute.xlu0 0
      %614 = vperm.xlu0 %613, %v576
      %v615 = vpop.permute.xlu0 %614
      %618 = vset.pattern.permute.xlu0 0
      %619 = vperm.xlu0 %618, %v577
      %v620 = vpop.permute.xlu0 %619
      %623 = vset.pattern.permute.xlu0 0
      %624 = vperm.xlu0 %623, %v578
      %v625 = vpop.permute.xlu0 %624
      %628 = vset.pattern.permute.xlu0 0
      %629 = vperm.xlu0 %628, %v579
      %v630 = vpop.permute.xlu0 %629
      %633 = vset.pattern.permute.xlu0 0
      %634 = vperm.xlu0 %633, %v580
      %v635 = vpop.permute.xlu0 %634
      %638 = vset.pattern.permute.xlu0 0
      %639 = vperm.xlu0 %638, %v581
      %v640 = vpop.permute.xlu0 %639
      %v654 = vunpack.c.l.b16 %v558
      %v655 = vunpack.c.l.b16 %v559
      %v656 = vunpack.c.l.b16 %v560
      %v657 = vunpack.c.l.b16 %v561
      %v658 = vunpack.c.l.b16 %v562
      %v659 = vunpack.c.l.b16 %v563
      %v660 = vunpack.c.l.b16 %v564
      %v661 = vunpack.c.l.b16 %v565
      %v662 = vunpack.c.l.b16 %v566
      %v663 = vunpack.c.l.b16 %v567
      %v664 = vunpack.c.l.b16 %v568
      %v665 = vunpack.c.l.b16 %v569
      %v666 = vpack.c.b16 %v655, %v654
      %v667 = vpack.c.b16 %v657, %v656
      %v668 = vpack.c.b16 %v659, %v658
      %v669 = vpack.c.b16 %v661, %v660
      %v670 = vpack.c.b16 %v663, %v662
      %v671 = vpack.c.b16 %v665, %v664
      %v674 = vunpack.c.l.s4 1983009808
      %v675 = vunpack.c.0.s8 %v674
      %v676 = vlaneseq
      %v677 = vshrl.u32 %v676, 7
      %v678 = vsub.s32 %v675, %v677
      %v679 = vrot.slane %v557, %v678
      %v680 = vcombine.high %v679, %v679
      %vm681 = vcmask 31744
      %v683 = vsel %vm681, %v666, 0
      %v686 = vsel %vm681, %v667, 0
      %v689 = vsel %vm681, %v668, 0
      %v692 = vsel %vm681, %v669, 0
      %v695 = vsel %vm681, %v670, 0
      %v698 = vsel %vm681, %v671, 0
      %vm700 = vcmask 1041408
      %v702 = vsel %vm700, %v679, 0
      %v705 = vsel %vm700, %v680, 0
      %707 = vmatprep.subr.bf16.mxu0 %v705
      %708 = vmatpush1.bf16.msra.mxu0 %v702
      %709 = vmatprep.subr.bf16.mxu0 0
      %710 = vmatpush1.bf16.msra.mxu0 0
      %711 = vmatprep.subr.bf16.mxu0 0
      %712 = vmatpush1.bf16.msra.mxu0 0
      %713 = vmatprep.subr.bf16.mxu0 0
      %714 = vmatpush1.bf16.msra.mxu0 0
      %715 = vmatprep.subr.bf16.mxu0 0
      %716 = vmatpush1.bf16.msra.mxu0 0
      %717 = vmatprep.subr.bf16.mxu0 0
      %718 = vmatpush1.bf16.msra.mxu0 0
      %719 = vmatprep.subr.bf16.mxu0 0
      %720 = vmatpush1.bf16.msra.mxu0 0
      %721 = vmatprep.subr.bf16.mxu0 0
      %722 = vmatpush1.bf16.msra.mxu0 0
      %723 = vmatprep.subr.bf16.mxu0 0
      %724 = vmatpush1.bf16.msra.mxu0 0
      %725 = vmatprep.subr.bf16.mxu0 0
      %726 = vmatpush1.bf16.msra.mxu0 0
      %727 = vmatprep.subr.bf16.mxu0 0
      %728 = vmatpush1.bf16.msra.mxu0 0
      %729 = vmatprep.subr.bf16.mxu0 0
      %730 = vmatpush1.bf16.msra.mxu0 0
      %731 = vmatprep.subr.bf16.mxu0 0
      %732 = vmatpush1.bf16.msra.mxu0 0
      %733 = vmatprep.subr.bf16.mxu0 0
      %734 = vmatpush1.bf16.msra.mxu0 0
      %735 = vmatprep.subr.bf16.mxu0 0
      %736 = vmatpush1.bf16.msra.mxu0 0
      %737 = vmatprep.subr.bf16.mxu0 0
      %738 = vmatpush1.bf16.msra.mxu0 0
      %739 = vmatprep.mubr.bf16.mxu0 0
      %740 = vmatmul.mubr.bf16.gmra.mrb[0].mxu0 %v683
      %v741 = vpop.f32.mrb[0].mxu0
      %v742 = vadd.f32 %v585, %v741
      %v743 = vpop.f32.mrb[0].mxu0
      %v744 = vadd.f32 %v585, %v743
      %v745 = vpop.f32.mrb[0].mxu0
      %v746 = vadd.f32 %v590, %v745
      %v747 = vpop.f32.mrb[0].mxu0
      %v748 = vadd.f32 %v590, %v747
      %749 = vmatprep.mubr.bf16.mxu0 0
      %750 = vmatmul.mubr.bf16.gmra.mrb[0].mxu0 %v686
      %v751 = vpop.f32.mrb[0].mxu0
      %v752 = vadd.f32 %v595, %v751
      %v753 = vpop.f32.mrb[0].mxu0
      %v754 = vadd.f32 %v595, %v753
      %v755 = vpop.f32.mrb[0].mxu0
      %v756 = vadd.f32 %v600, %v755
      %v757 = vpop.f32.mrb[0].mxu0
      %v758 = vadd.f32 %v600, %v757
      %759 = vmatprep.mubr.bf16.mxu0 0
      %760 = vmatmul.mubr.bf16.gmra.mrb[0].mxu0 %v689
      %v761 = vpop.f32.mrb[0].mxu0
      %v762 = vadd.f32 %v605, %v761
      %v763 = vpop.f32.mrb[0].mxu0
      %v764 = vadd.f32 %v605, %v763
      %v765 = vpop.f32.mrb[0].mxu0
      %v766 = vadd.f32 %v610, %v765
      %v767 = vpop.f32.mrb[0].mxu0
      %v768 = vadd.f32 %v610, %v767
      %769 = vmatprep.mubr.bf16.mxu0 0
      %770 = vmatmul.mubr.bf16.gmra.mrb[0].mxu0 %v692
      %v771 = vpop.f32.mrb[0].mxu0
      %v772 = vadd.f32 %v615, %v771
      %v773 = vpop.f32.mrb[0].mxu0
      %v774 = vadd.f32 %v615, %v773
      %v775 = vpop.f32.mrb[0].mxu0
      %v776 = vadd.f32 %v620, %v775
      %v777 = vpop.f32.mrb[0].mxu0
      %v778 = vadd.f32 %v620, %v777
      %779 = vmatprep.mubr.bf16.mxu0 0
      %780 = vmatmul.mubr.bf16.gmra.mrb[0].mxu0 %v695
      %v781 = vpop.f32.mrb[0].mxu0
      %v782 = vadd.f32 %v625, %v781
      %v783 = vpop.f32.mrb[0].mxu0
      %v784 = vadd.f32 %v625, %v783
      %v785 = vpop.f32.mrb[0].mxu0
      %v786 = vadd.f32 %v630, %v785
      %v787 = vpop.f32.mrb[0].mxu0
      %v788 = vadd.f32 %v630, %v787
      %789 = vmatprep.mubr.bf16.mxu0 0
      %790 = vmatmul.mubr.bf16.gmra.mrb[0].mxu0 %v698
      %v791 = vpop.f32.mrb[0].mxu0
      %v792 = vadd.f32 %v635, %v791
      %v793 = vpop.f32.mrb[0].mxu0
      %v794 = vadd.f32 %v635, %v793
      %v795 = vpop.f32.mrb[0].mxu0
      %v796 = vadd.f32 %v640, %v795
      %v797 = vpop.f32.mrb[0].mxu0
      %v798 = vadd.f32 %v640, %v797
      %799 = vdwg.mxu0
      %v800 = vmax.f32 %v782, %v786
      %v801 = vrot.slane %v800, 4
      %v802 = vmax.f32 %v800, %v801
      %v803 = vrot.slane %v802, 2
      %v804 = vmax.f32 %v802, %v803
      %v805 = vrot.slane %v804, 1
      %v806 = vmax.f32 %v804, %v805
      %v807 = vmax.f32 %v784, %v788
      %v808 = vrot.slane %v807, 4
      %v809 = vmax.f32 %v807, %v808
      %v810 = vrot.slane %v809, 2
      %v811 = vmax.f32 %v809, %v810
      %v812 = vrot.slane %v811, 1
      %v813 = vmax.f32 %v811, %v812
      %v814 = vsub.f32 %v782, %v806
      %v815 = vsub.f32 %v784, %v813
      %v816 = vsub.f32 %v786, %v806
      %v817 = vsub.f32 %v788, %v813
      %v818 = vmul.f32 %v814, 1.442695
      %v819 = vpow.pop %v818
      %v820 = vmul.f32 %v815, 1.442695
      %v821 = vpow.pop %v820
      %v822 = vmul.f32 %v816, 1.442695
      %v823 = vpow.pop %v822
      %v824 = vmul.f32 %v817, 1.442695
      %v825 = vpow.pop %v824
      %v826 = vadd.f32 %v819, %v823
      %v827 = vrot.slane %v826, 4
      %v828 = vadd.f32 %v826, %v827
      %v829 = vrot.slane %v828, 2
      %v830 = vadd.f32 %v828, %v829
      %v831 = vrot.slane %v830, 1
      %v832 = vadd.f32 %v830, %v831
      %v833 = vadd.f32 %v821, %v825
      %v834 = vrot.slane %v833, 4
      %v835 = vadd.f32 %v833, %v834
      %v836 = vrot.slane %v835, 2
      %v837 = vadd.f32 %v835, %v836
      %v838 = vrot.slane %v837, 1
      %v839 = vadd.f32 %v837, %v838
      %v840 = vrcp.pop %v832
      %v841 = vrcp.pop %v839
      %v842 = vmul.f32 %v832, %v840
      %v843 = vmul.f32 %v839, %v841
      %v844 = vsub.f32 2.0, %v842
      %v845 = vsub.f32 2.0, %v843
      %v846 = vmul.f32 %v840, %v844
      %v847 = vmul.f32 %v841, %v845
      %v848 = vmul.f32 %v819, %v846
      %v849 = vmul.f32 %v821, %v847
      %v850 = vmul.f32 %v823, %v846
      %v851 = vmul.f32 %v825, %v847
      %v852 = vpack.c.bf16 %v850, %v848
      %v853 = vpack.c.bf16 %v851, %v849
      %v856 = vunpack.c.l.b16 %v852
      %v857 = vunpack.c.l.b16 %v853
      %v858 = vunpack.c.h.b16 %v852
      %v859 = vunpack.c.h.b16 %v853
      %v860 = vpack.c.b16 %v857, %v856
      %v861 = vpack.c.b16 %v859, %v858
      %864 = vst [vmem:[%s500] sm:$0xff] %v860
      %865 = vst [vmem:[%s500 + $0x8] sm:$0xff] %v861
      %v866 = vmax.f32 %v792, %v796
      %v867 = vrot.slane %v866, 4
      %v868 = vmax.f32 %v866, %v867
      %v869 = vrot.slane %v868, 2
      %v870 = vmax.f32 %v868, %v869
      %v871 = vrot.slane %v870, 1
      %v872 = vmax.f32 %v870, %v871
      %v873 = vmax.f32 %v794, %v798
      %v874 = vrot.slane %v873, 4
      %v875 = vmax.f32 %v873, %v874
      %v876 = vrot.slane %v875, 2
      %v877 = vmax.f32 %v875, %v876
      %v878 = vrot.slane %v877, 1
      %v879 = vmax.f32 %v877, %v878
      %v880 = vsub.f32 %v792, %v872
      %v881 = vsub.f32 %v794, %v879
      %v882 = vsub.f32 %v796, %v872
      %v883 = vsub.f32 %v798, %v879
      %v884 = vmul.f32 %v880, 1.442695
      %v885 = vpow.pop %v884
      %v886 = vmul.f32 %v881, 1.442695
      %v887 = vpow.pop %v886
      %v888 = vmul.f32 %v882, 1.442695
      %v889 = vpow.pop %v888
      %v890 = vmul.f32 %v883, 1.442695
      %v891 = vpow.pop %v890
      %v892 = vadd.f32 %v885, %v889
      %v893 = vrot.slane %v892, 4
      %v894 = vadd.f32 %v892, %v893
      %v895 = vrot.slane %v894, 2
      %v896 = vadd.f32 %v894, %v895
      %v897 = vrot.slane %v896, 1
      %v898 = vadd.f32 %v896, %v897
      %v899 = vadd.f32 %v887, %v891
      %v900 = vrot.slane %v899, 4
      %v901 = vadd.f32 %v899, %v900
      %v902 = vrot.slane %v901, 2
      %v903 = vadd.f32 %v901, %v902
      %v904 = vrot.slane %v903, 1
      %v905 = vadd.f32 %v903, %v904
      %v906 = vrcp.pop %v898
      %v907 = vrcp.pop %v905
      %v908 = vmul.f32 %v898, %v906
      %v909 = vmul.f32 %v905, %v907
      %v910 = vsub.f32 2.0, %v908
      %v911 = vsub.f32 2.0, %v909
      %v912 = vmul.f32 %v906, %v910
      %v913 = vmul.f32 %v907, %v911
      %v914 = vmul.f32 %v885, %v912
      %v915 = vmul.f32 %v887, %v913
      %v916 = vmul.f32 %v889, %v912
      %v917 = vmul.f32 %v891, %v913
      %v918 = vpack.c.bf16 %v916, %v914
      %v919 = vpack.c.bf16 %v917, %v915
      %v922 = vunpack.c.l.b16 %v918
      %v923 = vunpack.c.l.b16 %v919
      %v924 = vunpack.c.h.b16 %v918
      %v925 = vunpack.c.h.b16 %v919
      %v926 = vpack.c.b16 %v923, %v922
      %v927 = vpack.c.b16 %v925, %v924
      %930 = vst [vmem:[%s514] sm:$0xff] %v926
      %931 = vst [vmem:[%s514 + $0x8] sm:$0xff] %v927
      %p932 = scmp.eq.s32.totalorder %s29, 0
      // Predicated region
      $region41: #{_fused_forward.1} parent=39 // pred_check
        %p933 = pneg %p932
      $region42: #{_fused_forward.1} parent=39 // pred_check_branch
        %935 = sbr.rel (%p933) target = $region44
      $region43: #{_fused_forward.1} parent=39 // pred_region
        %936 = vst [vmem:[#allocation2] sm:$0xff] 0.0
        %937 = vst [vmem:[#allocation2 + $0x8] sm:$0xff] 0.0
        %938 = vst [vmem:[#allocation2 + $0x10] sm:$0xff] 0.0
        %939 = vst [vmem:[#allocation2 + $0x18] sm:$0xff] 0.0
        %940 = vst [vmem:[#allocation2 + $0x20] sm:$0xff] 0.0
        %941 = vst [vmem:[#allocation2 + $0x28] sm:$0xff] 0.0
        %942 = vst [vmem:[#allocation2 + $0x30] sm:$0xff] 0.0
        %943 = vst [vmem:[#allocation2 + $0x38] sm:$0xff] 0.0
        %944 = vst [vmem:[#allocation3] sm:$0xff] 0.0
        %945 = vst [vmem:[#allocation3 + $0x8] sm:$0xff] 0.0
        %946 = vst [vmem:[#allocation3 + $0x10] sm:$0xff] 0.0
        %947 = vst [vmem:[#allocation3 + $0x18] sm:$0xff] 0.0
        %948 = vst [vmem:[#allocation3 + $0x20] sm:$0xff] 0.0
        %949 = vst [vmem:[#allocation3 + $0x28] sm:$0xff] 0.0
        %950 = vst [vmem:[#allocation3 + $0x30] sm:$0xff] 0.0
        %951 = vst [vmem:[#allocation3 + $0x38] sm:$0xff] 0.0
      $region44: #{_fused_forward.1} parent=39 // pred_fallthru
        _
      %v952 = vld [vmem:[#allocation2] sm:$0xff]
      %v953 = vld [vmem:[#allocation2 + $0x8] sm:$0xff]
      %v954 = vld [vmem:[#allocation2 + $0x10] sm:$0xff]
      %v955 = vld [vmem:[#allocation2 + $0x18] sm:$0xff]
      %v956 = vld [vmem:[#allocation2 + $0x20] sm:$0xff]
      %v957 = vld [vmem:[#allocation2 + $0x28] sm:$0xff]
      %v958 = vld [vmem:[#allocation2 + $0x30] sm:$0xff]
      %v959 = vld [vmem:[#allocation2 + $0x38] sm:$0xff]
      %v960 = vadd.f32 %v952, %v742
      %v961 = vadd.f32 %v953, %v744
      %v962 = vadd.f32 %v954, %v746
      %v963 = vadd.f32 %v955, %v748
      %v964 = vadd.f32 %v956, %v752
      %v965 = vadd.f32 %v957, %v754
      %v966 = vadd.f32 %v958, %v756
      %v967 = vadd.f32 %v959, %v758
      %968 = vst [vmem:[#allocation2] sm:$0xff] %v960
      %969 = vst [vmem:[#allocation2 + $0x8] sm:$0xff] %v961
      %970 = vst [vmem:[#allocation2 + $0x10] sm:$0xff] %v962
      %971 = vst [vmem:[#allocation2 + $0x18] sm:$0xff] %v963
      %972 = vst [vmem:[#allocation2 + $0x20] sm:$0xff] %v964
      %973 = vst [vmem:[#allocation2 + $0x28] sm:$0xff] %v965
      %974 = vst [vmem:[#allocation2 + $0x30] sm:$0xff] %v966
      %975 = vst [vmem:[#allocation2 + $0x38] sm:$0xff] %v967
      %v976 = vld [vmem:[#allocation3] sm:$0xff]
      %v977 = vld [vmem:[#allocation3 + $0x8] sm:$0xff]
      %v978 = vld [vmem:[#allocation3 + $0x10] sm:$0xff]
      %v979 = vld [vmem:[#allocation3 + $0x18] sm:$0xff]
      %v980 = vld [vmem:[#allocation3 + $0x20] sm:$0xff]
      %v981 = vld [vmem:[#allocation3 + $0x28] sm:$0xff]
      %v982 = vld [vmem:[#allocation3 + $0x30] sm:$0xff]
      %v983 = vld [vmem:[#allocation3 + $0x38] sm:$0xff]
      %v984 = vadd.f32 %v976, %v762
      %v985 = vadd.f32 %v977, %v764
      %v986 = vadd.f32 %v978, %v766
      %v987 = vadd.f32 %v979, %v768
      %v988 = vadd.f32 %v980, %v772
      %v989 = vadd.f32 %v981, %v774
      %v990 = vadd.f32 %v982, %v776
      %v991 = vadd.f32 %v983, %v778
      %992 = vst [vmem:[#allocation3] sm:$0xff] %v984
      %993 = vst [vmem:[#allocation3 + $0x8] sm:$0xff] %v985
      %994 = vst [vmem:[#allocation3 + $0x10] sm:$0xff] %v986
      %995 = vst [vmem:[#allocation3 + $0x18] sm:$0xff] %v987
      %996 = vst [vmem:[#allocation3 + $0x20] sm:$0xff] %v988
      %997 = vst [vmem:[#allocation3 + $0x28] sm:$0xff] %v989
      %998 = vst [vmem:[#allocation3 + $0x30] sm:$0xff] %v990
      %999 = vst [vmem:[#allocation3 + $0x38] sm:$0xff] %v991
      %p1000 = scmp.eq.s32.totalorder %s29, 1
      // Predicated region
      $region45: #{_fused_forward.1} parent=39 // pred_check
        %p1001 = pneg %p1000
      $region46: #{_fused_forward.1} parent=39 // pred_check_branch
        %1003 = sbr.rel (%p1001) target = $region48
      $region47: #{_fused_forward.1} parent=39 // pred_region
        %v1004 = vld [vmem:[#allocation2] sm:$0xff]
        %v1005 = vld [vmem:[#allocation2 + $0x8] sm:$0xff]
        %v1006 = vld [vmem:[#allocation2 + $0x10] sm:$0xff]
        %v1007 = vld [vmem:[#allocation2 + $0x18] sm:$0xff]
        %v1008 = vld [vmem:[#allocation2 + $0x20] sm:$0xff]
        %v1009 = vld [vmem:[#allocation2 + $0x28] sm:$0xff]
        %v1010 = vld [vmem:[#allocation2 + $0x30] sm:$0xff]
        %v1011 = vld [vmem:[#allocation2 + $0x38] sm:$0xff]
        %v1012 = vmul.f32 %v1004, 0.5
        %v1013 = vmul.f32 %v1005, 0.5
        %v1014 = vmul.f32 %v1006, 0.5
        %v1015 = vmul.f32 %v1007, 0.5
        %v1016 = vmul.f32 %v1008, 0.5
        %v1017 = vmul.f32 %v1009, 0.5
        %v1018 = vmul.f32 %v1010, 0.5
        %v1019 = vmul.f32 %v1011, 0.5
        %v1020 = vpack.c.bf16 %v1014, %v1012
        %v1021 = vpack.c.bf16 %v1015, %v1013
        %v1022 = vpack.c.bf16 %v1018, %v1016
        %v1023 = vpack.c.bf16 %v1019, %v1017
        %v1024 = vld [vmem:[#allocation3] sm:$0xff]
        %v1025 = vld [vmem:[#allocation3 + $0x8] sm:$0xff]
        %v1026 = vld [vmem:[#allocation3 + $0x10] sm:$0xff]
        %v1027 = vld [vmem:[#allocation3 + $0x18] sm:$0xff]
        %v1028 = vld [vmem:[#allocation3 + $0x20] sm:$0xff]
        %v1029 = vld [vmem:[#allocation3 + $0x28] sm:$0xff]
        %v1030 = vld [vmem:[#allocation3 + $0x30] sm:$0xff]
        %v1031 = vld [vmem:[#allocation3 + $0x38] sm:$0xff]
        %v1032 = vmul.f32 %v1024, 0.5
        %v1033 = vmul.f32 %v1025, 0.5
        %v1034 = vmul.f32 %v1026, 0.5
        %v1035 = vmul.f32 %v1027, 0.5
        %v1036 = vmul.f32 %v1028, 0.5
        %v1037 = vmul.f32 %v1029, 0.5
        %v1038 = vmul.f32 %v1030, 0.5
        %v1039 = vmul.f32 %v1031, 0.5
        %v1040 = vpack.c.bf16 %v1034, %v1032
        %v1041 = vpack.c.bf16 %v1035, %v1033
        %v1042 = vpack.c.bf16 %v1038, %v1036
        %v1043 = vpack.c.bf16 %v1039, %v1037
        %v1048 = vunpack.c.l.b16 %v1020
        %v1049 = vunpack.c.l.b16 %v1021
        %v1050 = vunpack.c.h.b16 %v1020
        %v1051 = vunpack.c.h.b16 %v1021
        %v1052 = vunpack.c.l.b16 %v1022
        %v1053 = vunpack.c.l.b16 %v1023
        %v1054 = vunpack.c.h.b16 %v1022
        %v1055 = vunpack.c.h.b16 %v1023
        %v1056 = vpack.c.b16 %v1049, %v1048
        %v1057 = vpack.c.b16 %v1051, %v1050
        %v1058 = vpack.c.b16 %v1053, %v1052
        %v1059 = vpack.c.b16 %v1055, %v1054
        %1064 = vst [vmem:[%s524] sm:$0xff] %v1056
        %1065 = vst [vmem:[%s524 + $0x8] sm:$0xff] %v1057
        %1066 = vst [vmem:[%s524 + $0x10] sm:$0xff] %v1058
        %1067 = vst [vmem:[%s524 + $0x18] sm:$0xff] %v1059
        %v1072 = vunpack.c.l.b16 %v1040
        %v1073 = vunpack.c.l.b16 %v1041
        %v1074 = vunpack.c.h.b16 %v1040
        %v1075 = vunpack.c.h.b16 %v1041
        %v1076 = vunpack.c.l.b16 %v1042
        %v1077 = vunpack.c.l.b16 %v1043
        %v1078 = vunpack.c.h.b16 %v1042
        %v1079 = vunpack.c.h.b16 %v1043
        %v1080 = vpack.c.b16 %v1073, %v1072
        %v1081 = vpack.c.b16 %v1075, %v1074
        %v1082 = vpack.c.b16 %v1077, %v1076
        %v1083 = vpack.c.b16 %v1079, %v1078
        %1088 = vst [vmem:[%s534] sm:$0xff] %v1080
        %1089 = vst [vmem:[%s534 + $0x8] sm:$0xff] %v1081
        %1090 = vst [vmem:[%s534 + $0x10] sm:$0xff] %v1082
        %1091 = vst [vmem:[%s534 + $0x18] sm:$0xff] %v1083
        %v1092 = vld [vmem:[%s3] sm:$0xf]
        %v1093 = vld [vmem:[%s4] sm:$0xff]
        %1095 = vset.pattern.permute.xlu0 0
        %1096 = vperm.xlu0 %1095, %v1093
        %v1097 = vpop.permute.xlu0 %1096
        %vm1099 = vcmask 261120
        %v1101 = vsel %vm1099, %v1092, 0
        %1103 = vmatprep.subr.bf16.mxu0 %v1021
        %1104 = vmatpush1.bf16.msra.mxu0 %v1020
        %1105 = vmatprep.subr.bf16.mxu0 %v1023
        %1106 = vmatpush1.bf16.msra.mxu0 %v1022
        %1107 = vmatprep.subr.bf16.mxu0 0
        %1108 = vmatpush1.bf16.msra.mxu0 0
        %1109 = vmatprep.subr.bf16.mxu0 0
        %1110 = vmatpush1.bf16.msra.mxu0 0
        %1111 = vmatprep.subr.bf16.mxu0 0
        %1112 = vmatpush1.bf16.msra.mxu0 0
        %1113 = vmatprep.subr.bf16.mxu0 0
        %1114 = vmatpush1.bf16.msra.mxu0 0
        %1115 = vmatprep.subr.bf16.mxu0 0
        %1116 = vmatpush1.bf16.msra.mxu0 0
        %1117 = vmatprep.subr.bf16.mxu0 0
        %1118 = vmatpush1.bf16.msra.mxu0 0
        %1119 = vmatprep.subr.bf16.mxu0 0
        %1120 = vmatpush1.bf16.msra.mxu0 0
        %1121 = vmatprep.subr.bf16.mxu0 0
        %1122 = vmatpush1.bf16.msra.mxu0 0
        %1123 = vmatprep.subr.bf16.mxu0 0
        %1124 = vmatpush1.bf16.msra.mxu0 0
        %1125 = vmatprep.subr.bf16.mxu0 0
        %1126 = vmatpush1.bf16.msra.mxu0 0
        %1127 = vmatprep.subr.bf16.mxu0 0
        %1128 = vmatpush1.bf16.msra.mxu0 0
        %1129 = vmatprep.subr.bf16.mxu0 0
        %1130 = vmatpush1.bf16.msra.mxu0 0
        %1131 = vmatprep.subr.bf16.mxu0 0
        %1132 = vmatpush1.bf16.msra.mxu0 0
        %1133 = vmatprep.subr.bf16.mxu0 0
        %1134 = vmatpush1.bf16.msra.mxu0 0
        %1135 = vmatprep.mubr.bf16.mxu0 0
        %1136 = vmatmul.mubr.bf16.gmra.mrb[0].mxu0 %v1101
        %v1137 = vpop.f32.mrb[0].mxu0
        %v1138 = vadd.f32 %v1097, %v1137
        %v1139 = vpop.f32.mrb[0].mxu0
        %v1140 = vadd.f32 %v1097, %v1139
        %v1141 = vpop.f32.mrb[0].mxu0
        %v1142 = vpop.f32.mrb[0].mxu0
        %1143 = vdwg.mxu0
        %1144 = vst [vmem:[%s544] sm:$0xff] %v1138
        %1145 = vst [vmem:[%s544 + $0x8] sm:$0xff] %v1140
        %s1146 = scalar_lea.vmem %s3, 4
        %v1147 = vld [vmem:[%s1146] sm:$0xf]
        %s1148 = scalar_lea.vmem %s4, 8
        %v1149 = vld [vmem:[%s1148] sm:$0xff]
        %1151 = vset.pattern.permute.xlu0 0
        %1152 = vperm.xlu0 %1151, %v1149
        %v1153 = vpop.permute.xlu0 %1152
        %v1156 = vsel %vm1099, %v1147, 0
        %1158 = vmatprep.subr.bf16.mxu0 %v1041
        %1159 = vmatpush1.bf16.msra.mxu0 %v1040
        %1160 = vmatprep.subr.bf16.mxu0 %v1043
        %1161 = vmatpush1.bf16.msra.mxu0 %v1042
        %1162 = vmatprep.subr.bf16.mxu0 0
        %1163 = vmatpush1.bf16.msra.mxu0 0
        %1164 = vmatprep.subr.bf16.mxu0 0
        %1165 = vmatpush1.bf16.msra.mxu0 0
        %1166 = vmatprep.subr.bf16.mxu0 0
        %1167 = vmatpush1.bf16.msra.mxu0 0
        %1168 = vmatprep.subr.bf16.mxu0 0
        %1169 = vmatpush1.bf16.msra.mxu0 0
        %1170 = vmatprep.subr.bf16.mxu0 0
        %1171 = vmatpush1.bf16.msra.mxu0 0
        %1172 = vmatprep.subr.bf16.mxu0 0
        %1173 = vmatpush1.bf16.msra.mxu0 0
        %1174 = vmatprep.subr.bf16.mxu0 0
        %1175 = vmatpush1.bf16.msra.mxu0 0
        %1176 = vmatprep.subr.bf16.mxu0 0
        %1177 = vmatpush1.bf16.msra.mxu0 0
        %1178 = vmatprep.subr.bf16.mxu0 0
        %1179 = vmatpush1.bf16.msra.mxu0 0
        %1180 = vmatprep.subr.bf16.mxu0 0
        %1181 = vmatpush1.bf16.msra.mxu0 0
        %1182 = vmatprep.subr.bf16.mxu0 0
        %1183 = vmatpush1.bf16.msra.mxu0 0
        %1184 = vmatprep.subr.bf16.mxu0 0
        %1185 = vmatpush1.bf16.msra.mxu0 0
        %1186 = vmatprep.subr.bf16.mxu0 0
        %1187 = vmatpush1.bf16.msra.mxu0 0
        %1188 = vmatprep.subr.bf16.mxu0 0
        %1189 = vmatpush1.bf16.msra.mxu0 0
        %1190 = vmatprep.mubr.bf16.mxu0 0
        %1191 = vmatmul.mubr.bf16.gmra.mrb[0].mxu0 %v1156
        %v1192 = vpop.f32.mrb[0].mxu0
        %v1193 = vadd.f32 %v1153, %v1192
        %v1194 = vpop.f32.mrb[0].mxu0
        %v1195 = vadd.f32 %v1153, %v1194
        %v1196 = vpop.f32.mrb[0].mxu0
        %v1197 = vpop.f32.mrb[0].mxu0
        %1198 = vdwg.mxu0
        %1199 = vst [vmem:[%s554] sm:$0xff] %v1193
        %1200 = vst [vmem:[%s554 + $0x8] sm:$0xff] %v1195
      $region48: #{_fused_forward.1} parent=39 // pred_fallthru
        _
      %s1201 = smul.u32 2, %s28
      %p1202 = scmp.lt.s32.totalorder %s27, 1
      %s1203 = scalar_select %p1202, %s27, 1
      %p1204 = scmp.lt.s32.totalorder %s29, 1
      %s1205 = scalar_select %p1204, %s29, 1
      %p1206 = scmp.lt.s32.totalorder %s1201, 1
      %s1207 = scalar_select %p1206, %s1201, 1
      %s1208 = smul.addr %s1205, 4
      %s1209 = sadd.s32 %s1207, %s1208
      %s1210 = smul.addr %s1203, 8
      %s1211 = sadd.s32 %s1209, %s1210
      %s1212 = smul.addr %s1211, 4
      %s1213 = scalar_lea.vmem %s5, %s1212
      %s1214 = smul.u32 2, %s28
      %p1215 = scmp.lt.s32.totalorder %s27, 1
      %s1216 = scalar_select %p1215, %s27, 1
      %p1217 = scmp.lt.s32.totalorder %s29, 1
      %s1218 = scalar_select %p1217, %s29, 1
      %p1219 = scmp.lt.s32.totalorder %s1214, 1
      %s1220 = scalar_select %p1219, %s1214, 1
      %s1221 = smul.addr %s1218, 4
      %s1222 = sadd.s32 %s1220, %s1221
      %s1223 = smul.addr %s1216, 8
      %s1224 = sadd.s32 %s1222, %s1223
      %s1225 = smul.addr %s1224, 4
      %s1226 = scalar_lea.vmem %s6, %s1225
      %s1227 = smul.u32 2, %s28
      %p1228 = scmp.lt.s32.totalorder %s27, 1
      %s1229 = scalar_select %p1228, %s27, 1
      %p1230 = scmp.lt.s32.totalorder %s1227, 1
      %s1231 = scalar_select %p1230, %s1227, 1
      %s1232 = smul.addr %s1229, 8
      %s1233 = sadd.s32 %s1231, %s1232
      %s1234 = smul.addr %s1233, 4
      %s1235 = scalar_lea.vmem %s7, %s1234
      %s1236 = smul.u32 2, %s28
      %p1237 = scmp.lt.s32.totalorder %s27, 1
      %s1238 = scalar_select %p1237, %s27, 1
      %p1239 = scmp.lt.s32.totalorder %s1236, 1
      %s1240 = scalar_select %p1239, %s1236, 1
      %s1241 = smul.addr %s1238, 8
      %s1242 = sadd.s32 %s1240, %s1241
      %s1243 = smul.addr %s1242, 4
      %s1244 = scalar_lea.vmem %s8, %s1243
      %s1245 = smul.u32 2, %s28
      %p1246 = scmp.lt.s32.totalorder %s27, 1
      %s1247 = scalar_select %p1246, %s27, 1
      %p1248 = scmp.lt.s32.totalorder %s1245, 1
      %s1249 = scalar_select %p1248, %s1245, 1
      %s1250 = smul.addr %s1247, 2
      %s1251 = sadd.s32 %s1249, %s1250
      %s1252 = smul.addr %s1251, 8
      %s1253 = scalar_lea.vmem %s9, %s1252
      %s1254 = smul.u32 2, %s28
      %p1255 = scmp.lt.s32.totalorder %s27, 1
      %s1256 = scalar_select %p1255, %s27, 1
      %p1257 = scmp.lt.s32.totalorder %s1254, 1
      %s1258 = scalar_select %p1257, %s1254, 1
      %s1259 = smul.addr %s1256, 2
      %s1260 = sadd.s32 %s1258, %s1259
      %s1261 = smul.addr %s1260, 8
      %s1262 = scalar_lea.vmem %s10, %s1261
      // Predicated region
      $region49: #{_fused_forward.1} parent=39 // pred_check
        %p1263 = pneg %p177
      $region50: #{_fused_forward.1} parent=39 // pred_check_branch
        %1265 = sbr.rel (%p1263) target = $region52
      $region51: #{_fused_forward.1} parent=39 // pred_region
        %s1266 = smul.u32 2, %s28
      $region52: #{_fused_forward.1} parent=39 // pred_fallthru
        _
      // Predicated region
      $region53: #{_fused_forward.1} parent=39 // pred_check
        %p1267 = pneg %p207
      $region54: #{_fused_forward.1} parent=39 // pred_check_branch
        %1269 = sbr.rel (%p1267) target = $region56
      $region55: #{_fused_forward.1} parent=39 // pred_region
        %s1270 = smul.u32 2, %s28
      $region56: #{_fused_forward.1} parent=39 // pred_fallthru
        _
      // Predicated region
      $region57: #{_fused_forward.1} parent=39 // pred_check
        %p1271 = pneg %p235
      $region58: #{_fused_forward.1} parent=39 // pred_check_branch
        %1273 = sbr.rel (%p1271) target = $region60
      $region59: #{_fused_forward.1} parent=39 // pred_region
        %s1274 = smul.u32 2, %s28
      $region60: #{_fused_forward.1} parent=39 // pred_fallthru
        _
      // Predicated region
      $region61: #{_fused_forward.1} parent=39 // pred_check
        %p1275 = pneg %p263
      $region62: #{_fused_forward.1} parent=39 // pred_check_branch
        %1277 = sbr.rel (%p1275) target = $region64
      $region63: #{_fused_forward.1} parent=39 // pred_region
        %s1278 = smul.u32 2, %s28
      $region64: #{_fused_forward.1} parent=39 // pred_fallthru
        _
      // Predicated region
      $region65: #{_fused_forward.1} parent=39 // pred_check
        %p1279 = pneg %p291
      $region66: #{_fused_forward.1} parent=39 // pred_check_branch
        %1281 = sbr.rel (%p1279) target = $region68
      $region67: #{_fused_forward.1} parent=39 // pred_region
        %s1282 = smul.u32 2, %s28
      $region68: #{_fused_forward.1} parent=39 // pred_fallthru
        _
      // Predicated region
      $region69: #{_fused_forward.1} parent=39 // pred_check
        %p1283 = pneg %p319
      $region70: #{_fused_forward.1} parent=39 // pred_check_branch
        %1285 = sbr.rel (%p1283) target = $region72
      $region71: #{_fused_forward.1} parent=39 // pred_region
        %s1286 = smul.u32 2, %s28
      $region72: #{_fused_forward.1} parent=39 // pred_fallthru
        _
    $region40: #{_fused_forward.1} parent=5 // pred_fallthru
      _
    %p1287 = scmp.le.s32.totalorder 2, %s17
    // Predicated region
    $region73: #{_fused_forward.1} parent=5 // pred_check
      %p1288 = pneg %p1287
    $region74: #{_fused_forward.1} parent=5 // pred_check_branch
      %1290 = sbr.rel (%p1288) target = $region76
    $region75: #{_fused_forward.1} parent=5 // pred_region
      %s1291 = ssub.s32 %s17, 2
      // Predicated region
      $region77: #{_fused_forward.1} parent=75 // pred_check
        %p1292 = pneg %p183
      $region78: #{_fused_forward.1} parent=75 // pred_check_branch
        %1294 = sbr.rel (%p1292) target = $region80
      $region79: #{_fused_forward.1} parent=75 // pred_region
        %s1295 = smul.u32 2, %s31
        %p1296 = scmp.lt.s32.totalorder %s30, 1
        %s1297 = scalar_select %p1296, %s30, 1
        %p1298 = scmp.lt.s32.totalorder %s32, 1
        %s1299 = scalar_select %p1298, %s32, 1
        %p1300 = scmp.lt.s32.totalorder %s1295, 1
        %s1301 = scalar_select %p1300, %s1295, 1
        %s1302 = smul.addr %s1299, 4
        %s1303 = sadd.s32 %s1301, %s1302
        %s1304 = smul.addr %s1297, 8
        %s1305 = sadd.s32 %s1303, %s1304
        %s1306 = smul.addr %s1305, 4
        %s1307 = scalar_lea.vmem %s5, %s1306
      $region80: #{_fused_forward.1} parent=75 // pred_fallthru
        _
      // Predicated region
      $region81: #{_fused_forward.1} parent=75 // pred_check
        %p1308 = pneg %p213
      $region82: #{_fused_forward.1} parent=75 // pred_check_branch
        %1310 = sbr.rel (%p1308) target = $region84
      $region83: #{_fused_forward.1} parent=75 // pred_region
        %s1311 = smul.u32 2, %s31
        %p1312 = scmp.lt.s32.totalorder %s30, 1
        %s1313 = scalar_select %p1312, %s30, 1
        %p1314 = scmp.lt.s32.totalorder %s32, 1
        %s1315 = scalar_select %p1314, %s32, 1
        %p1316 = scmp.lt.s32.totalorder %s1311, 1
        %s1317 = scalar_select %p1316, %s1311, 1
        %s1318 = smul.addr %s1315, 4
        %s1319 = sadd.s32 %s1317, %s1318
        %s1320 = smul.addr %s1313, 8
        %s1321 = sadd.s32 %s1319, %s1320
        %s1322 = smul.addr %s1321, 4
        %s1323 = scalar_lea.vmem %s6, %s1322
      $region84: #{_fused_forward.1} parent=75 // pred_fallthru
        _
      // Predicated region
      $region85: #{_fused_forward.1} parent=75 // pred_check
        %p1324 = pneg %p241
      $region86: #{_fused_forward.1} parent=75 // pred_check_branch
        %1326 = sbr.rel (%p1324) target = $region88
      $region87: #{_fused_forward.1} parent=75 // pred_region
        %s1327 = smul.u32 2, %s31
        %p1328 = scmp.lt.s32.totalorder %s30, 1
        %s1329 = scalar_select %p1328, %s30, 1
        %p1330 = scmp.lt.s32.totalorder %s1327, 1
        %s1331 = scalar_select %p1330, %s1327, 1
        %s1332 = smul.addr %s1329, 8
        %s1333 = sadd.s32 %s1331, %s1332
        %s1334 = smul.addr %s1333, 4
        %s1335 = scalar_lea.vmem %s7, %s1334
      $region88: #{_fused_forward.1} parent=75 // pred_fallthru
        _
      // Predicated region
      $region89: #{_fused_forward.1} parent=75 // pred_check
        %p1336 = pneg %p269
      $region90: #{_fused_forward.1} parent=75 // pred_check_branch
        %1338 = sbr.rel (%p1336) target = $region92
      $region91: #{_fused_forward.1} parent=75 // pred_region
        %s1339 = smul.u32 2, %s31
        %p1340 = scmp.lt.s32.totalorder %s30, 1
        %s1341 = scalar_select %p1340, %s30, 1
        %p1342 = scmp.lt.s32.totalorder %s1339, 1
        %s1343 = scalar_select %p1342, %s1339, 1
        %s1344 = smul.addr %s1341, 8
        %s1345 = sadd.s32 %s1343, %s1344
        %s1346 = smul.addr %s1345, 4
        %s1347 = scalar_lea.vmem %s8, %s1346
      $region92: #{_fused_forward.1} parent=75 // pred_fallthru
        _
      // Predicated region
      $region93: #{_fused_forward.1} parent=75 // pred_check
        %p1348 = pneg %p297
      $region94: #{_fused_forward.1} parent=75 // pred_check_branch
        %1350 = sbr.rel (%p1348) target = $region96
      $region95: #{_fused_forward.1} parent=75 // pred_region
        %s1351 = smul.u32 2, %s31
        %p1352 = scmp.lt.s32.totalorder %s30, 1
        %s1353 = scalar_select %p1352, %s30, 1
        %p1354 = scmp.lt.s32.totalorder %s1351, 1
        %s1355 = scalar_select %p1354, %s1351, 1
        %s1356 = smul.addr %s1353, 2
        %s1357 = sadd.s32 %s1355, %s1356
        %s1358 = smul.addr %s1357, 8
        %s1359 = scalar_lea.vmem %s9, %s1358
      $region96: #{_fused_forward.1} parent=75 // pred_fallthru
        _
      // Predicated region
      $region97: #{_fused_forward.1} parent=75 // pred_check
        %p1360 = pneg %p325
      $region98: #{_fused_forward.1} parent=75 // pred_check_branch
        %1362 = sbr.rel (%p1360) target = $region100
      $region99: #{_fused_forward.1} parent=75 // pred_region
        %s1363 = smul.u32 2, %s31
        %p1364 = scmp.lt.s32.totalorder %s30, 1
        %s1365 = scalar_select %p1364, %s30, 1
        %p1366 = scmp.lt.s32.totalorder %s1363, 1
        %s1367 = scalar_select %p1366, %s1363, 1
        %s1368 = smul.addr %s1365, 2
        %s1369 = sadd.s32 %s1367, %s1368
        %s1370 = smul.addr %s1369, 8
        %s1371 = scalar_lea.vmem %s10, %s1370
      $region100: #{_fused_forward.1} parent=75 // pred_fallthru
        _
    $region76: #{_fused_forward.1} parent=5 // pred_fallthru
      _
  $region6: #{_fused_forward.1} parent=0 // loop_footer
    %s21 = sadd.s32 1, %s17
  $region7: #{_fused_forward.1} parent=0 // loop_footer_branch
    %16 = sbr.rel target = $region3
  $region8: #{_fused_forward.1} parent=0 // loop_exit
    _

</llo_original>
